<compile_context>
chip_gen: v7x
topology: tpu7x:2x2x1
jax: 0.10.0
libtpu: 0.0.40
codegen_flags: <defaults>
</compile_context>

<pallas_src>
import jax
import jax.numpy as jnp
from jax.experimental import pallas as pl
from jax.experimental.pallas import tpu as pltpu

_EPS = 1e-12  # F.normalize default eps


def _round_up(v, m):
    return (v + m - 1) // m * m


def _tpu_vmem_budget():
    """(per-core VMEM budget with headroom, crude TensorCores-per-chip guess)."""
    cap = 64 << 20  # conservative default == v7x per-TensorCore VMEM
    try:
        cap = int(pltpu.get_tpu_info().vmem_capacity_bytes)
    except Exception:
        pass
    ncores = 2 if cap <= (64 << 20) else 1          # v7x: 2 TCs, 64 MiB each
    budget = max(cap - (16 << 20), 32 << 20)        # leave compiler headroom
    return budget, ncores


def _choose_tiles(n, d, p, itemsize, budget, ncores):
    """Pick (tn, tk, kt) so the VMEM working set fits `budget`."""
    # ---- row tile ----------------------------------------------------------
    if n <= 256:
        tn = n  # single tile; block == full dim satisfies the (8,128) rule
    else:
        # Full 128-row MXU tiles; keep >= 2 N-steps per TensorCore so the DMA
        # pipeline overlaps and megacore sharding stays balanced.  Allow
        # bigger tiles on the 128-MiB parts (v5e/v6e) where larger N tiles buy
        # HBM-roofline efficiency.
        cap = 512 if budget > (80 << 20) else 256
        tn = min(cap, max(128, (pl.cdiv(n, 2 * ncores) // 128) * 128))

    # ---- K tile over D -----------------------------------------------------
    def fits(tk, kt):
        w_buf = (1 if kt == 1 else 2) * tk * p * itemsize  # weight slab
        x_buf = 2 * tn * tk * itemsize                     # double-buffered x
        x_tmp = tn * tk * 4                                # f32 temp for sumsq
        o_buf = 2 * tn * p * 4 + tn * p * 4                # out (dbuf) + f32 acc
        misc = 8 * p * 4 + tn * 8 + (2 << 20)
        return w_buf + x_buf + x_tmp + o_buf + misc <= budget

    kt, tk = 1, d
    while not fits(tk, kt) and tk > 128:
        kt += 1
        tk = _round_up(pl.cdiv(d, kt), 128)
    kt = pl.cdiv(d, tk)
    return tn, tk, kt


def _make_kernel(d, tk, ragged_k):
    def kernel(x_ref, w_ref, mask_ref, bias_ref, out_ref, acc_ref, ss_ref):
        # x_ref:    (TN, TK)  bf16 (or f32 fallback)
        # w_ref:    (TK, P)   fused [scale*normalize(w_cls).T | w_bbox.T | 0]
        # mask_ref: (1, P)    f32, 1.0 on classifier columns else 0.0
        # bias_ref: (1, P)    f32, bbox bias on its columns else 0.0
        # out_ref:  (TN, P)   f32 lane-dense fused [scores | deltas | pad]
        # acc_ref:  (TN, P)   f32 scratch; ss_ref: (TN, 1) f32 scratch
        k = pl.program_id(1)

        @pl.when(k == 0)
        def _init():
            acc_ref[...] = jnp.zeros_like(acc_ref)
            ss_ref[...] = jnp.zeros_like(ss_ref)

        x = x_ref[...]
        if ragged_k:
            # Last K block reads past D: zero the invalid columns so they
            # contribute nothing to the matmul or the row norms.
            col = jax.lax.broadcasted_iota(jnp.int32, x.shape, 1) + k * tk
            x = jnp.where(col < d, x, jnp.zeros_like(x))

        # Row L2 norm accumulation in f32 (reduction only, no (TN,D) divide).
        xf = x.astype(jnp.float32)
        ss_ref[...] += jnp.sum(xf * xf, axis=1, keepdims=True)

        # Single fused MXU pass for both heads, f32 accumulation.
        acc_ref[...] += jnp.dot(x, w_ref[...], preferred_element_type=jnp.float32)

        @pl.when(k == pl.num_programs(1) - 1)
        def _finalize():
            inv_norm = jax.lax.rsqrt(jnp.maximum(ss_ref[...], _EPS * _EPS))
            # classifier cols get 1/||x||, bbox cols get 1.0 -- one FMA.
            col_scale = 1.0 + mask_ref[...] * (inv_norm - 1.0)
            out_ref[...] = acc_ref[...] * col_scale + bias_ref[...]

    return kernel


def prepare_cosine_head(w_cls, scale, w_bbox, b_bbox, mxu_dtype=jnp.bfloat16):
    """One-time fused-head prep (hoist out of the forward; cache on weights)."""
    c1, d = w_cls.shape
    r = w_bbox.shape[0]
    p = _round_up(c1 + r, 128)                  # lane-dense fused output width

    w_cls32 = w_cls.astype(jnp.float32)
    inv_wn = jax.lax.rsqrt(jnp.maximum(
        jnp.sum(w_cls32 * w_cls32, axis=1, keepdims=True), _EPS * _EPS))
    wn = w_cls32 * inv_wn * jnp.asarray(scale, jnp.float32)

    w_fused = jnp.zeros((d, p), jnp.float32)
    w_fused = w_fused.at[:, :c1].set(wn.T)
    w_fused = w_fused.at[:, c1:c1 + r].set(w_bbox.astype(jnp.float32).T)
    w_fused = w_fused.astype(mxu_dtype)

    col = jnp.arange(p, dtype=jnp.int32)
    cls_mask = (col < c1).astype(jnp.float32).reshape(1, p)
    bias_pad = jnp.zeros((1, p), jnp.float32)
    bias_pad = bias_pad.at[0, c1:c1 + r].set(b_bbox.astype(jnp.float32))

    return dict(w_fused=w_fused, cls_mask=cls_mask, bias_pad=bias_pad,
                c1=c1, r=r, d=d, p=p)


def cosine_fastrcnn_forward(x, head):
    """x: (N, D) or (N, C, H, W); `head` is the dict from prepare_cosine_head."""
    n = x.shape[0]
    x2 = x.reshape(n, -1)                        # torch.flatten(x, 1)
    d, p, c1, r = head["d"], head["p"], head["c1"], head["r"]
    assert x2.shape[1] == d, (x2.shape, d)

    w_fused = head["w_fused"]
    # Feed the MXU in the weight dtype (bf16 by default): halves the x stream
    # and hits the fast MXU path; in a real model x arrives bf16 / cast fuses.
    if x2.dtype != w_fused.dtype:
        x2 = x2.astype(w_fused.dtype)
    itemsize = jnp.dtype(x2.dtype).itemsize

    budget, ncores = _tpu_vmem_budget()
    tn, tk, kt = _choose_tiles(n, d, p, itemsize, budget, ncores)
    grid = (pl.cdiv(n, tn), kt)
    ragged_k = (kt > 1) and (d % tk != 0)
    kernel = _make_kernel(d, tk, ragged_k)

    def run(single_buffer_invariants):
        def spec(shape, index_map, invariant=False):
            if invariant and single_buffer_invariants:
                return pl.BlockSpec(shape, index_map,
                                    pipeline_mode=pl.Buffered(1))
            return pl.BlockSpec(shape, index_map)

        return pl.pallas_call(
            kernel,
            out_shape=jax.ShapeDtypeStruct((n, p), jnp.float32),
            grid_spec=pltpu.PrefetchScalarGridSpec(
                num_scalar_prefetch=0,
                grid=grid,
                in_specs=[
                    pl.BlockSpec((tn, tk), lambda i, k: (i, k)),          # x
                    spec((tk, p), lambda i, k: (k, 0), invariant=(kt == 1)),
                    spec((1, p), lambda i, k: (0, 0), invariant=True),    # mask
                    spec((1, p), lambda i, k: (0, 0), invariant=True),    # bias
                ],
                out_specs=pl.BlockSpec((tn, p), lambda i, k: (i, 0)),
                scratch_shapes=[
                    pltpu.VMEM((tn, p), jnp.float32),   # fused f32 accumulator
                    pltpu.VMEM((tn, 1), jnp.float32),   # sum(x^2) accumulator
                ],
            ),
            compiler_params=pltpu.CompilerParams(
                dimension_semantics=("parallel", "arbitrary"),
                vmem_limit_bytes=int(budget),
            ),
        )(x2, w_fused, head["cls_mask"], head["bias_pad"])

    try:
        out = run(single_buffer_invariants=True)
    except Exception:
        # pipeline_mode/Buffered(1) not supported on this build: retry with
        # default (double-buffered) BlockSpecs.
        out = run(single_buffer_invariants=False)

    scores = out[:, :c1]
    deltas = out[:, c1:c1 + r]
    return scores, deltas


def init_params(key, input_size, num_classes, cls_agnostic_bbox_reg=False,
                box_dim=4, scale_init=20.0):
    """Deterministic parameter init mirroring the PyTorch __init__."""
    k1, k2 = jax.random.split(key)
    c1 = num_classes + 1
    num_bbox_reg_classes = 1 if cls_agnostic_bbox_reg else num_classes
    r = num_bbox_reg_classes * box_dim
    w_cls = 0.01 * jax.random.normal(k1, (c1, input_size), jnp.float32)
    w_bbox = 0.001 * jax.random.normal(k2, (r, input_size), jnp.float32)
    b_bbox = jnp.zeros((r,), jnp.float32)        # nn.init.constant_(bias, 0)
    scale = jnp.float32(scale_init)              # scale_mode='learn', init 20.0
    return w_cls, scale, w_bbox, b_bbox


def _reference(x, w_cls, scale, w_bbox, b_bbox):
    """Plain-JAX f32 reference mirroring the PyTorch forward."""
    n = x.shape[0]
    x2 = x.reshape(n, -1).astype(jnp.float32)
    xn = x2 / jnp.maximum(jnp.linalg.norm(x2, axis=1, keepdims=True), _EPS)
    wn = w_cls / jnp.maximum(jnp.linalg.norm(w_cls, axis=1, keepdims=True), _EPS)
    scores = scale * (xn @ wn.T)
    deltas = x2 @ w_bbox.T + b_bbox
    return scores, deltas


if __name__ == "__main__":
    key = jax.random.PRNGKey(0)
    kx, kp = jax.random.split(key)

    # Small shapes consistent with the module: NCHW ROI features.
    N, C, H, W = 2, 4, 16, 16
    num_classes = 7
    box_dim = 4
    input_size = C * H * W

    x = jax.random.normal(kx, (N, C, H, W), jnp.float32)
    w_cls, scale, w_bbox, b_bbox = init_params(
        kp, input_size, num_classes, cls_agnostic_bbox_reg=False,
        box_dim=box_dim, scale_init=20.0)

    # Fused-head prep runs once at "model load" (hoisted out of the forward).
    head = prepare_cosine_head(w_cls, scale, w_bbox, b_bbox)

    scores, deltas = cosine_fastrcnn_forward(x, head)
    jax.block_until_ready((scores, deltas))

    ref_scores, ref_deltas = _reference(x, w_cls, scale, w_bbox, b_bbox)
    assert scores.shape == (N, num_classes + 1)
    assert deltas.shape == (N, num_classes * box_dim)
    # bf16 MXU path => relaxed tolerances vs the f32 reference.
    assert jnp.allclose(scores, ref_scores, atol=8e-2, rtol=5e-2), (
        float(jnp.max(jnp.abs(scores - ref_scores))))
    assert jnp.allclose(deltas, ref_deltas, atol=5e-3, rtol=5e-2), (
        float(jnp.max(jnp.abs(deltas - ref_deltas))))

    print("KERNEL_OK")
</pallas_src>

<mosaic_0001>
module attributes {stable_mosaic.version = 11 : i64} {
  func.func @kernel(%arg0: i32, %arg1: i32, %arg2: memref<2x1024xbf16, #tpu.memory_space<vmem>>, %arg3: memref<1024x128xbf16, #tpu.memory_space<vmem>>, %arg4: memref<1x128xf32, #tpu.memory_space<vmem>>, %arg5: memref<1x128xf32, #tpu.memory_space<vmem>>, %arg6: memref<2x128xf32, #tpu.memory_space<vmem>>, %arg7: memref<2x128xf32, #tpu.memory_space<vmem>>, %arg8: memref<2x1xf32, #tpu.memory_space<vmem>>) attributes {dimension_semantics = [#tpu.dimension_semantics<parallel>, #tpu.dimension_semantics<arbitrary>], iteration_bounds = array<i64: 1, 1>, scalar_prefetch = 0 : i64, scratch_operands = 2 : i64, tpu.core_type = #tpu.core_type<tc>, window_params = [{transform_indices = @transform_0, window_bounds = array<i64: 2, 1024>}, {pipeline_mode = #tpu.pipeline_mode<synchronous>, transform_indices = @transform_1, window_bounds = array<i64: 1024, 128>}, {pipeline_mode = #tpu.pipeline_mode<synchronous>, transform_indices = @transform_2, window_bounds = array<i64: 1, 128>}, {pipeline_mode = #tpu.pipeline_mode<synchronous>, transform_indices = @transform_3, window_bounds = array<i64: 1, 128>}, {transform_indices = @transform_4, window_bounds = array<i64: 2, 128>}]} {
    %c0_i32 = arith.constant 0 : i32
    %0 = arith.cmpi eq, %arg1, %c0_i32 : i32
    %1 = arith.extui %0 : i1 to i32
    %c0_i32_0 = arith.constant 0 : i32
    %2 = arith.cmpi ne, %1, %c0_i32_0 : i32
    scf.if %2 {
      %cst_15 = arith.constant 0.000000e+00 : f32
      %19 = vector.broadcast %cst_15 : f32 to vector<2x128xf32>
      %c0_16 = arith.constant 0 : index
      %c0_17 = arith.constant 0 : index
      %20 = vector.load %arg7[%c0_16, %c0_17] : memref<2x128xf32, #tpu.memory_space<vmem>>, vector<2x128xf32>
      tpu.vector_store %arg7[%c0_16, %c0_17], %19 {strides = array<i32>} : memref<2x128xf32, #tpu.memory_space<vmem>>, vector<2x128xf32>,
      %cst_18 = arith.constant 0.000000e+00 : f32
      %21 = vector.broadcast %cst_18 : f32 to vector<2x1xf32>
      %c0_19 = arith.constant 0 : index
      %c0_20 = arith.constant 0 : index
      %22 = vector.load %arg8[%c0_19, %c0_20] : memref<2x1xf32, #tpu.memory_space<vmem>>, vector<2x1xf32>
      tpu.vector_store %arg8[%c0_19, %c0_20], %21 {strides = array<i32>} : memref<2x1xf32, #tpu.memory_space<vmem>>, vector<2x1xf32>,
    } else {
    }
    %c0 = arith.constant 0 : index
    %c0_1 = arith.constant 0 : index
    %3 = vector.load %arg2[%c0, %c0_1] : memref<2x1024xbf16, #tpu.memory_space<vmem>>, vector<2x1024xbf16>
    %4 = arith.extf %3 : vector<2x1024xbf16> to vector<2x1024xf32>
    %c0_2 = arith.constant 0 : index
    %c0_3 = arith.constant 0 : index
    %5 = vector.load %arg8[%c0_2, %c0_3] : memref<2x1xf32, #tpu.memory_space<vmem>>, vector<2x1xf32>
    %6 = arith.mulf %4, %4 : vector<2x1024xf32>
    %cst = arith.constant dense<0.000000e+00> : vector<2xf32>
    %7 = vector.multi_reduction <add>, %6, %cst [1] : vector<2x1024xf32> to vector<2xf32>
    %8 = vector.shape_cast %7 : vector<2xf32> to vector<2x1xf32>
    %9 = arith.addf %5, %8 : vector<2x1xf32>
    %c0_4 = arith.constant 0 : index
    %c0_5 = arith.constant 0 : index
    %10 = vector.load %arg8[%c0_4, %c0_5] : memref<2x1xf32, #tpu.memory_space<vmem>>, vector<2x1xf32>
    tpu.vector_store %arg8[%c0_4, %c0_5], %9 {strides = array<i32>} : memref<2x1xf32, #tpu.memory_space<vmem>>, vector<2x1xf32>,
    %c0_6 = arith.constant 0 : index
    %c0_7 = arith.constant 0 : index
    %11 = vector.load %arg7[%c0_6, %c0_7] : memref<2x128xf32, #tpu.memory_space<vmem>>, vector<2x128xf32>
    %c0_8 = arith.constant 0 : index
    %c0_9 = arith.constant 0 : index
    %12 = vector.load %arg3[%c0_8, %c0_9] : memref<1024x128xbf16, #tpu.memory_space<vmem>>, vector<1024x128xbf16>
    %cst_10 = arith.constant dense<0.000000e+00> : vector<2x128xf32>
    %13 = tpu.matmul %3, %12, %cst_10 {dimension_numbers = #tpu.dot_dimension_numbers<[1], [0], [0], [1], [0, 0, 1, 1], [], []>} : vector<2x1024xbf16>, vector<1024x128xbf16>, vector<2x128xf32> -> vector<2x128xf32>
    %14 = arith.addf %11, %13 : vector<2x128xf32>
    %c0_11 = arith.constant 0 : index
    %c0_12 = arith.constant 0 : index
    %15 = vector.load %arg7[%c0_11, %c0_12] : memref<2x128xf32, #tpu.memory_space<vmem>>, vector<2x128xf32>
    tpu.vector_store %arg7[%c0_11, %c0_12], %14 {strides = array<i32>} : memref<2x128xf32, #tpu.memory_space<vmem>>, vector<2x128xf32>,
    %c0_i32_13 = arith.constant 0 : i32
    %16 = arith.cmpi eq, %arg1, %c0_i32_13 : i32
    %17 = arith.extui %16 : i1 to i32
    %c0_i32_14 = arith.constant 0 : i32
    %18 = arith.cmpi ne, %17, %c0_i32_14 : i32
    scf.if %18 {
      %c0_15 = arith.constant 0 : index
      %c0_16 = arith.constant 0 : index
      %19 = vector.load %arg8[%c0_15, %c0_16] : memref<2x1xf32, #tpu.memory_space<vmem>>, vector<2x1xf32>
      %cst_17 = arith.constant 1.000000e-24 : f32
      %20 = vector.broadcast %cst_17 : f32 to vector<2x1xf32>
      %21 = arith.maximumf %19, %20 : vector<2x1xf32>
      %22 = math.rsqrt %21 : vector<2x1xf32>
      %c0_18 = arith.constant 0 : index
      %c0_19 = arith.constant 0 : index
      %23 = vector.load %arg4[%c0_18, %c0_19] : memref<1x128xf32, #tpu.memory_space<vmem>>, vector<1x128xf32>
      %cst_20 = arith.constant 1.000000e+00 : f32
      %24 = vector.broadcast %cst_20 : f32 to vector<2x1xf32>
      %25 = arith.subf %22, %24 : vector<2x1xf32>
      %26 = vector.broadcast %23 : vector<1x128xf32> to vector<2x128xf32>
      %27 = vector.broadcast %25 : vector<2x1xf32> to vector<2x128xf32>
      %28 = arith.mulf %26, %27 : vector<2x128xf32>
      %cst_21 = arith.constant 1.000000e+00 : f32
      %29 = vector.broadcast %cst_21 : f32 to vector<2x128xf32>
      %30 = arith.addf %29, %28 : vector<2x128xf32>
      %c0_22 = arith.constant 0 : index
      %c0_23 = arith.constant 0 : index
      %31 = vector.load %arg7[%c0_22, %c0_23] : memref<2x128xf32, #tpu.memory_space<vmem>>, vector<2x128xf32>
      %32 = arith.mulf %31, %30 : vector<2x128xf32>
      %c0_24 = arith.constant 0 : index
      %c0_25 = arith.constant 0 : index
      %33 = vector.load %arg5[%c0_24, %c0_25] : memref<1x128xf32, #tpu.memory_space<vmem>>, vector<1x128xf32>
      %34 = vector.broadcast %33 : vector<1x128xf32> to vector<2x128xf32>
      %35 = arith.addf %32, %34 : vector<2x128xf32>
      %c0_26 = arith.constant 0 : index
      %c0_27 = arith.constant 0 : index
      %36 = vector.load %arg6[%c0_26, %c0_27] : memref<2x128xf32, #tpu.memory_space<vmem>>, vector<2x128xf32>
      tpu.vector_store %arg6[%c0_26, %c0_27], %35 {strides = array<i32>} : memref<2x128xf32, #tpu.memory_space<vmem>>, vector<2x128xf32>,
    } else {
    }
    return
  }
  func.func @transform_0(%arg0: i32, %arg1: i32) -> (i32, i32) {
    %c0_i32 = arith.constant 0 : i32
    return %arg0, %arg1 : i32, i32
  }
  func.func @transform_1(%arg0: i32, %arg1: i32) -> (i32, i32) {
    %c0_i32 = arith.constant 0 : i32
    %c0_i32_0 = arith.constant 0 : i32
    return %arg1, %c0_i32 : i32, i32
  }
  func.func @transform_2(%arg0: i32, %arg1: i32) -> (i32, i32) {
    %c0_i32 = arith.constant 0 : i32
    %c0_i32_0 = arith.constant 0 : i32
    %c0_i32_1 = arith.constant 0 : i32
    return %c0_i32, %c0_i32_0 : i32, i32
  }
  func.func @transform_3(%arg0: i32, %arg1: i32) -> (i32, i32) {
    %c0_i32 = arith.constant 0 : i32
    %c0_i32_0 = arith.constant 0 : i32
    %c0_i32_1 = arith.constant 0 : i32
    return %c0_i32, %c0_i32_0 : i32, i32
  }
  func.func @transform_4(%arg0: i32, %arg1: i32) -> (i32, i32) {
    %c0_i32 = arith.constant 0 : i32
    %c0_i32_0 = arith.constant 0 : i32
    return %arg0, %c0_i32 : i32, i32
  }
}

module attributes {stable_mosaic.version = 11 : i64} {
  func.func @kernel(%arg0: i32, %arg1: i32, %arg2: memref<2x1024xbf16, #tpu.memory_space<vmem>>, %arg3: memref<1024x128xbf16, #tpu.memory_space<vmem>>, %arg4: memref<1x128xf32, #tpu.memory_space<vmem>>, %arg5: memref<1x128xf32, #tpu.memory_space<vmem>>, %arg6: memref<2x128xf32, #tpu.memory_space<vmem>>, %arg7: memref<2x128xf32, #tpu.memory_space<vmem>>, %arg8: memref<2x1xf32, #tpu.memory_space<vmem>>) attributes {dimension_semantics = [#tpu.dimension_semantics<parallel>, #tpu.dimension_semantics<arbitrary>], iteration_bounds = array<i64: 1, 1>, scalar_prefetch = 0 : i64, scratch_operands = 2 : i64, tpu.core_type = #tpu.core_type<tc>, window_params = [{transform_indices = @transform_0, window_bounds = array<i64: 2, 1024>}, {transform_indices = @transform_1, window_bounds = array<i64: 1024, 128>}, {pipeline_mode = #tpu.pipeline_mode<synchronous>, transform_indices = @transform_2, window_bounds = array<i64: 1, 128>}, {pipeline_mode = #tpu.pipeline_mode<synchronous>, transform_indices = @transform_3, window_bounds = array<i64: 1, 128>}, {transform_indices = @transform_4, window_bounds = array<i64: 2, 128>}]} {
    %c0_i32 = arith.constant 0 : i32
    %0 = arith.cmpi eq, %arg1, %c0_i32 : i32
    %1 = arith.extui %0 : i1 to i32
    %c0_i32_0 = arith.constant 0 : i32
    %2 = arith.cmpi ne, %1, %c0_i32_0 : i32
    scf.if %2 {
      %cst_15 = arith.constant 0.000000e+00 : f32
      %19 = vector.broadcast %cst_15 : f32 to vector<2x128xf32>
      %c0_16 = arith.constant 0 : index
      %c0_17 = arith.constant 0 : index
      %20 = vector.load %arg7[%c0_16, %c0_17] : memref<2x128xf32, #tpu.memory_space<vmem>>, vector<2x128xf32>
      tpu.vector_store %arg7[%c0_16, %c0_17], %19 {strides = array<i32>} : memref<2x128xf32, #tpu.memory_space<vmem>>, vector<2x128xf32>,
      %cst_18 = arith.constant 0.000000e+00 : f32
      %21 = vector.broadcast %cst_18 : f32 to vector<2x1xf32>
      %c0_19 = arith.constant 0 : index
      %c0_20 = arith.constant 0 : index
      %22 = vector.load %arg8[%c0_19, %c0_20] : memref<2x1xf32, #tpu.memory_space<vmem>>, vector<2x1xf32>
      tpu.vector_store %arg8[%c0_19, %c0_20], %21 {strides = array<i32>} : memref<2x1xf32, #tpu.memory_space<vmem>>, vector<2x1xf32>,
    } else {
    }
    %c0 = arith.constant 0 : index
    %c0_1 = arith.constant 0 : index
    %3 = vector.load %arg2[%c0, %c0_1] : memref<2x1024xbf16, #tpu.memory_space<vmem>>, vector<2x1024xbf16>
    %4 = arith.extf %3 : vector<2x1024xbf16> to vector<2x1024xf32>
    %c0_2 = arith.constant 0 : index
    %c0_3 = arith.constant 0 : index
    %5 = vector.load %arg8[%c0_2, %c0_3] : memref<2x1xf32, #tpu.memory_space<vmem>>, vector<2x1xf32>
    %6 = arith.mulf %4, %4 : vector<2x1024xf32>
    %cst = arith.constant dense<0.000000e+00> : vector<2xf32>
    %7 = vector.multi_reduction <add>, %6, %cst [1] : vector<2x1024xf32> to vector<2xf32>
    %8 = vector.shape_cast %7 : vector<2xf32> to vector<2x1xf32>
    %9 = arith.addf %5, %8 : vector<2x1xf32>
    %c0_4 = arith.constant 0 : index
    %c0_5 = arith.constant 0 : index
    %10 = vector.load %arg8[%c0_4, %c0_5] : memref<2x1xf32, #tpu.memory_space<vmem>>, vector<2x1xf32>
    tpu.vector_store %arg8[%c0_4, %c0_5], %9 {strides = array<i32>} : memref<2x1xf32, #tpu.memory_space<vmem>>, vector<2x1xf32>,
    %c0_6 = arith.constant 0 : index
    %c0_7 = arith.constant 0 : index
    %11 = vector.load %arg7[%c0_6, %c0_7] : memref<2x128xf32, #tpu.memory_space<vmem>>, vector<2x128xf32>
    %c0_8 = arith.constant 0 : index
    %c0_9 = arith.constant 0 : index
    %12 = vector.load %arg3[%c0_8, %c0_9] : memref<1024x128xbf16, #tpu.memory_space<vmem>>, vector<1024x128xbf16>
    %cst_10 = arith.constant dense<0.000000e+00> : vector<2x128xf32>
    %13 = tpu.matmul %3, %12, %cst_10 {dimension_numbers = #tpu.dot_dimension_numbers<[1], [0], [0], [1], [0, 0, 1, 1], [], []>} : vector<2x1024xbf16>, vector<1024x128xbf16>, vector<2x128xf32> -> vector<2x128xf32>
    %14 = arith.addf %11, %13 : vector<2x128xf32>
    %c0_11 = arith.constant 0 : index
    %c0_12 = arith.constant 0 : index
    %15 = vector.load %arg7[%c0_11, %c0_12] : memref<2x128xf32, #tpu.memory_space<vmem>>, vector<2x128xf32>
    tpu.vector_store %arg7[%c0_11, %c0_12], %14 {strides = array<i32>} : memref<2x128xf32, #tpu.memory_space<vmem>>, vector<2x128xf32>,
    %c0_i32_13 = arith.constant 0 : i32
    %16 = arith.cmpi eq, %arg1, %c0_i32_13 : i32
    %17 = arith.extui %16 : i1 to i32
    %c0_i32_14 = arith.constant 0 : i32
    %18 = arith.cmpi ne, %17, %c0_i32_14 : i32
    scf.if %18 {
      %c0_15 = arith.constant 0 : index
      %c0_16 = arith.constant 0 : index
      %19 = vector.load %arg8[%c0_15, %c0_16] : memref<2x1xf32, #tpu.memory_space<vmem>>, vector<2x1xf32>
      %cst_17 = arith.constant 1.000000e-24 : f32
      %20 = vector.broadcast %cst_17 : f32 to vector<2x1xf32>
      %21 = arith.maximumf %19, %20 : vector<2x1xf32>
      %22 = math.rsqrt %21 : vector<2x1xf32>
      %c0_18 = arith.constant 0 : index
      %c0_19 = arith.constant 0 : index
      %23 = vector.load %arg4[%c0_18, %c0_19] : memref<1x128xf32, #tpu.memory_space<vmem>>, vector<1x128xf32>
      %cst_20 = arith.constant 1.000000e+00 : f32
      %24 = vector.broadcast %cst_20 : f32 to vector<2x1xf32>
      %25 = arith.subf %22, %24 : vector<2x1xf32>
      %26 = vector.broadcast %23 : vector<1x128xf32> to vector<2x128xf32>
      %27 = vector.broadcast %25 : vector<2x1xf32> to vector<2x128xf32>
      %28 = arith.mulf %26, %27 : vector<2x128xf32>
      %cst_21 = arith.constant 1.000000e+00 : f32
      %29 = vector.broadcast %cst_21 : f32 to vector<2x128xf32>
      %30 = arith.addf %29, %28 : vector<2x128xf32>
      %c0_22 = arith.constant 0 : index
      %c0_23 = arith.constant 0 : index
      %31 = vector.load %arg7[%c0_22, %c0_23] : memref<2x128xf32, #tpu.memory_space<vmem>>, vector<2x128xf32>
      %32 = arith.mulf %31, %30 : vector<2x128xf32>
      %c0_24 = arith.constant 0 : index
      %c0_25 = arith.constant 0 : index
      %33 = vector.load %arg5[%c0_24, %c0_25] : memref<1x128xf32, #tpu.memory_space<vmem>>, vector<1x128xf32>
      %34 = vector.broadcast %33 : vector<1x128xf32> to vector<2x128xf32>
      %35 = arith.addf %32, %34 : vector<2x128xf32>
      %c0_26 = arith.constant 0 : index
      %c0_27 = arith.constant 0 : index
      %36 = vector.load %arg6[%c0_26, %c0_27] : memref<2x128xf32, #tpu.memory_space<vmem>>, vector<2x128xf32>
      tpu.vector_store %arg6[%c0_26, %c0_27], %35 {strides = array<i32>} : memref<2x128xf32, #tpu.memory_space<vmem>>, vector<2x128xf32>,
    } else {
    }
    return
  }
  func.func @transform_0(%arg0: i32, %arg1: i32) -> (i32, i32) {
    %c0_i32 = arith.constant 0 : i32
    return %arg0, %arg1 : i32, i32
  }
  func.func @transform_1(%arg0: i32, %arg1: i32) -> (i32, i32) {
    %c0_i32 = arith.constant 0 : i32
    %c0_i32_0 = arith.constant 0 : i32
    return %arg1, %c0_i32 : i32, i32
  }
  func.func @transform_2(%arg0: i32, %arg1: i32) -> (i32, i32) {
    %c0_i32 = arith.constant 0 : i32
    %c0_i32_0 = arith.constant 0 : i32
    %c0_i32_1 = arith.constant 0 : i32
    return %c0_i32, %c0_i32_0 : i32, i32
  }
  func.func @transform_3(%arg0: i32, %arg1: i32) -> (i32, i32) {
    %c0_i32 = arith.constant 0 : i32
    %c0_i32_0 = arith.constant 0 : i32
    %c0_i32_1 = arith.constant 0 : i32
    return %c0_i32, %c0_i32_0 : i32, i32
  }
  func.func @transform_4(%arg0: i32, %arg1: i32) -> (i32, i32) {
    %c0_i32 = arith.constant 0 : i32
    %c0_i32_0 = arith.constant 0 : i32
    return %arg0, %c0_i32 : i32, i32
  }
}

</mosaic_0001>

<llo_original>
// kernel: tpu_custom_call.1
$region0: #{tpu_custom_call.1}
  #allocation0 [shape = 'u32[]', space=smem, size = 0x4, offset = 0x4, fixed_abs, tag = 'smem constant byte address 0x4 - core index']
  #allocation1 [shape = 'u32[144,128]{1,0:T(1,128)}', space=vmem, size = 0x12000, scoped, tag = 'internal scratch']
  #allocation2 [shape = 'f32[2,128]{1,0:T(2,128)}', space=vmem, size = 0x400, scoped, tag = 'scratch operand']
  #allocation3 [shape = 'f32[2,1]{1,0:T(2,128)}', space=vmem, size = 0x400, scoped, tag = 'scratch operand']
  %s0 = inlined_call_operand.hbm [shape: bf16[2,1024], index: 0, kind: input, shape index: {}]
  %s1 = inlined_call_operand.hbm [shape: bf16[1024,128], index: 1, kind: input, shape index: {}]
  %s2 = inlined_call_operand.vmem [shape: f32[1,128], index: 2, kind: input, shape index: {}]
  %s3 = inlined_call_operand.vmem [shape: f32[1,128], index: 3, kind: input, shape index: {}]
  %s4 = inlined_call_operand.hbm [shape: f32[2,128], index: 4, kind: output, shape index: {}]
  %s5 = sld [smem:[#allocation0]]
  $region42: #{tpu_custom_call.1} parent=0
    _
  %s7 = ssub.s32 1, %s5
  %s8 = scalar_select 0, %s7, %s5
  $region1: #{tpu_custom_call.1} parent=0
    #allocation4 [shape = 'u8[4096]{0}', space=vmem, size = 0x1000, scoped, tag = 'input window, operand 0, single buffered']
    #allocation5 [shape = 's32[1]{0}', space=sflag, size = 0x4, scoped, tag = 'scoped memory for tpu_custom_call.1']
    #allocation6 [shape = 's32[1]{0}', space=sflag, size = 0x4, scoped, tag = 'scoped memory for tpu_custom_call.1']
    #allocation7 [shape = 'u8[262144]{0}', space=vmem, size = 0x40000, scoped, tag = 'input window, operand 1, single buffered']
    #allocation8 [shape = 's32[1]{0}', space=sflag, size = 0x4, scoped, tag = 'scoped memory for tpu_custom_call.1']
    #allocation9 [shape = 'u8[1024]{0}', space=vmem, size = 0x400, scoped, tag = 'output window, operand 0, single buffered']
    %9 = vsyncpa [#allocation5], 0
    %10 = vsyncpa [#allocation8], 0
    %11 = vsyncpa [#allocation6], 0
    // Predicated region
    $region2: #{tpu_custom_call.1} parent=1 // pred_check
      _
    $region3: #{tpu_custom_call.1} parent=1 // pred_check_branch
      %13 = sbr.rel (0) target = $region5
    $region4: #{tpu_custom_call.1} parent=1 // pred_region
      %s15 = ssub.s32 128, 128
      %16 = vsyncadd [#allocation5], %s15
      %s18 = sshll.u32 [#allocation4], 4
      %s19 = int_to_ptr.vmem [resolvable:$true] %s18
      %21 = dma.hbm_to_vmem [thread:$0]  %s0, 128, %s19, [#allocation5]
    $region5: #{tpu_custom_call.1} parent=1 // pred_fallthru
      _
    // Predicated region
    $region6: #{tpu_custom_call.1} parent=1 // pred_check
      _
    $region7: #{tpu_custom_call.1} parent=1 // pred_check_branch
      %23 = sbr.rel (0) target = $region9
    $region8: #{tpu_custom_call.1} parent=1 // pred_region
      %s25 = ssub.s32 8192, 8192
      %26 = vsyncadd [#allocation8], %s25
      %s27 = sshll.u32 [#allocation7], 4
      %s28 = int_to_ptr.vmem [resolvable:$true] %s27
      %33 = dma.hbm_to_vmem [thread:$0]  %s1, 8192, %s28, [#allocation8], 64, 64, 4
    $region9: #{tpu_custom_call.1} parent=1 // pred_fallthru
      _
    // Predicated region
    $region10: #{tpu_custom_call.1} parent=1 // pred_check
      _
    $region11: #{tpu_custom_call.1} parent=1 // pred_check_branch
      %35 = sbr.rel (0) target = $region13
    $region12: #{tpu_custom_call.1} parent=1 // pred_region
      _
    $region13: #{tpu_custom_call.1} parent=1 // pred_fallthru
      _
    // Predicated region
    $region14: #{tpu_custom_call.1} parent=1 // pred_check
      _
    $region15: #{tpu_custom_call.1} parent=1 // pred_check_branch
      %37 = sbr.rel (0) target = $region17
    $region16: #{tpu_custom_call.1} parent=1 // pred_region
      _
    $region17: #{tpu_custom_call.1} parent=1 // pred_fallthru
      _
    // Predicated region
    $region18: #{tpu_custom_call.1} parent=1 // pred_check
      _
    $region19: #{tpu_custom_call.1} parent=1 // pred_check_branch
      %39 = sbr.rel (0) target = $region21
    $region20: #{tpu_custom_call.1} parent=1 // pred_region
      %40 = dma.done [#allocation5], 128
    $region21: #{tpu_custom_call.1} parent=1 // pred_fallthru
      _
    // Predicated region
    $region22: #{tpu_custom_call.1} parent=1 // pred_check
      _
    $region23: #{tpu_custom_call.1} parent=1 // pred_check_branch
      %42 = sbr.rel (0) target = $region25
    $region24: #{tpu_custom_call.1} parent=1 // pred_region
      %43 = dma.done [#allocation8], 8192
    $region25: #{tpu_custom_call.1} parent=1 // pred_fallthru
      _
    %p45 = scmp.eq.s32.totalorder 0, 0
    // Predicated region
    $region26: #{tpu_custom_call.1} parent=1 // pred_check
      %p46 = pneg %p45
    $region27: #{tpu_custom_call.1} parent=1 // pred_check_branch
      %48 = sbr.rel (%p46) target = $region29
    $region28: #{tpu_custom_call.1} parent=1 // pred_region
      %49 = vst [vmem:[#allocation2] sm:$0x3] 0.0
      %vm50 = vcmask 1024
      %51 = vst.msk [vmem:[#allocation3] sm:$0x3] %vm50, 0.0
    $region29: #{tpu_custom_call.1} parent=1 // pred_fallthru
      _
    %v52 = vld [vmem:[#allocation4] sm:$0xff]
    %v53 = vunpack.c.l.bf16 %v52
    %v54 = vunpack.c.h.bf16 %v52
    %v55 = vld [vmem:[#allocation3] sm:$0x3]
    %v56 = vmul.f32 %v53, %v53
    %v57 = vmul.f32 %v54, %v54
    %v60 = vcombine.high %v56, %v56
    %v62 = vunpack.c.l.s4 1983009808
    %v63 = vunpack.c.0.s8 %v62
    %v64 = vlaneseq
    %v65 = vshrl.u32 %v64, 7
    %v66 = vsub.s32 %v63, %v65
    %v67 = vrot.slane %v56, %v66
    %v69 = vunpack.c.l.s4 1983009808
    %v70 = vunpack.c.0.s8 %v69
    %v71 = vlaneseq
    %v72 = vshrl.u32 %v71, 7
    %v73 = vsub.s32 %v70, %v72
    %v74 = vrot.slane %v60, %v73
    %v75 = vcombine.high %v67, %v67
    %v76 = vcombine.high %v74, %v74
    %v77 = vcombine.high %v57, %v57
    %v79 = vunpack.c.l.s4 1983009808
    %v80 = vunpack.c.0.s8 %v79
    %v81 = vlaneseq
    %v82 = vshrl.u32 %v81, 7
    %v83 = vsub.s32 %v80, %v82
    %v84 = vrot.slane %v57, %v83
    %v86 = vunpack.c.l.s4 1983009808
    %v87 = vunpack.c.0.s8 %v86
    %v88 = vlaneseq
    %v89 = vshrl.u32 %v88, 7
    %v90 = vsub.s32 %v87, %v89
    %v91 = vrot.slane %v77, %v90
    %v92 = vcombine.high %v84, %v84
    %v93 = vcombine.high %v91, %v91
    %vm102 = vcmask 1041408
    %v103 = vsel %vm102, %v67, 0.0
    %v104 = vsel %vm102, %v75, 0.0
    %v105 = vadd.f32 %v103, %v104
    %v106 = vsel %vm102, %v74, 0.0
    %v107 = vadd.f32 %v105, %v106
    %v108 = vsel %vm102, %v76, 0.0
    %v109 = vadd.f32 %v107, %v108
    %v110 = vsel %vm102, %v84, 0.0
    %v111 = vadd.f32 %v109, %v110
    %v112 = vsel %vm102, %v92, 0.0
    %v113 = vadd.f32 %v111, %v112
    %v114 = vsel %vm102, %v91, 0.0
    %v115 = vadd.f32 %v113, %v114
    %v116 = vsel %vm102, %v93, 0.0
    %v117 = vadd.f32 %v115, %v116
    %118 = vadd.xlane.f32.xlu0 %v117
    %v119 = vpop.xlane.xlu0 %118
    %v120 = vadd.f32 %v55, %v119
    %vm121 = vcmask 1024
    %122 = vst.msk [vmem:[#allocation3] sm:$0x3] %vm121, %v120
    %v123 = vld [vmem:[#allocation2] sm:$0x3]
    %v124 = vld [vmem:[#allocation7] sm:$0xf]
    %v125 = vld [vmem:[#allocation7 + $0x4] sm:$0xf]
    %v126 = vld [vmem:[#allocation7 + $0x8] sm:$0xf]
    %v127 = vld [vmem:[#allocation7 + $0xc] sm:$0xf]
    %v128 = vld [vmem:[#allocation7 + $0x10] sm:$0xf]
    %v129 = vld [vmem:[#allocation7 + $0x14] sm:$0xf]
    %v130 = vld [vmem:[#allocation7 + $0x18] sm:$0xf]
    %v131 = vld [vmem:[#allocation7 + $0x1c] sm:$0xf]
    %v132 = vld [vmem:[#allocation7 + $0x20] sm:$0xf]
    %v133 = vld [vmem:[#allocation7 + $0x24] sm:$0xf]
    %v134 = vld [vmem:[#allocation7 + $0x28] sm:$0xf]
    %v135 = vld [vmem:[#allocation7 + $0x2c] sm:$0xf]
    %v136 = vld [vmem:[#allocation7 + $0x30] sm:$0xf]
    %v137 = vld [vmem:[#allocation7 + $0x34] sm:$0xf]
    %v138 = vld [vmem:[#allocation7 + $0x38] sm:$0xf]
    %v139 = vld [vmem:[#allocation7 + $0x3c] sm:$0xf]
    %v140 = vld [vmem:[#allocation7 + $0x40] sm:$0xf]
    %v141 = vld [vmem:[#allocation7 + $0x44] sm:$0xf]
    %v142 = vld [vmem:[#allocation7 + $0x48] sm:$0xf]
    %v143 = vld [vmem:[#allocation7 + $0x4c] sm:$0xf]
    %v144 = vld [vmem:[#allocation7 + $0x50] sm:$0xf]
    %v145 = vld [vmem:[#allocation7 + $0x54] sm:$0xf]
    %v146 = vld [vmem:[#allocation7 + $0x58] sm:$0xf]
    %v147 = vld [vmem:[#allocation7 + $0x5c] sm:$0xf]
    %v148 = vld [vmem:[#allocation7 + $0x60] sm:$0xf]
    %v149 = vld [vmem:[#allocation7 + $0x64] sm:$0xf]
    %v150 = vld [vmem:[#allocation7 + $0x68] sm:$0xf]
    %v151 = vld [vmem:[#allocation7 + $0x6c] sm:$0xf]
    %v152 = vld [vmem:[#allocation7 + $0x70] sm:$0xf]
    %v153 = vld [vmem:[#allocation7 + $0x74] sm:$0xf]
    %v154 = vld [vmem:[#allocation7 + $0x78] sm:$0xf]
    %v155 = vld [vmem:[#allocation7 + $0x7c] sm:$0xf]
    %v156 = vld [vmem:[#allocation7 + $0x80] sm:$0xf]
    %v157 = vld [vmem:[#allocation7 + $0x84] sm:$0xf]
    %v158 = vld [vmem:[#allocation7 + $0x88] sm:$0xf]
    %v159 = vld [vmem:[#allocation7 + $0x8c] sm:$0xf]
    %v160 = vld [vmem:[#allocation7 + $0x90] sm:$0xf]
    %v161 = vld [vmem:[#allocation7 + $0x94] sm:$0xf]
    %v162 = vld [vmem:[#allocation7 + $0x98] sm:$0xf]
    %v163 = vld [vmem:[#allocation7 + $0x9c] sm:$0xf]
    %v164 = vld [vmem:[#allocation7 + $0xa0] sm:$0xf]
    %v165 = vld [vmem:[#allocation7 + $0xa4] sm:$0xf]
    %v166 = vld [vmem:[#allocation7 + $0xa8] sm:$0xf]
    %v167 = vld [vmem:[#allocation7 + $0xac] sm:$0xf]
    %v168 = vld [vmem:[#allocation7 + $0xb0] sm:$0xf]
    %v169 = vld [vmem:[#allocation7 + $0xb4] sm:$0xf]
    %v170 = vld [vmem:[#allocation7 + $0xb8] sm:$0xf]
    %v171 = vld [vmem:[#allocation7 + $0xbc] sm:$0xf]
    %v172 = vld [vmem:[#allocation7 + $0xc0] sm:$0xf]
    %v173 = vld [vmem:[#allocation7 + $0xc4] sm:$0xf]
    %v174 = vld [vmem:[#allocation7 + $0xc8] sm:$0xf]
    %v175 = vld [vmem:[#allocation7 + $0xcc] sm:$0xf]
    %v176 = vld [vmem:[#allocation7 + $0xd0] sm:$0xf]
    %v177 = vld [vmem:[#allocation7 + $0xd4] sm:$0xf]
    %v178 = vld [vmem:[#allocation7 + $0xd8] sm:$0xf]
    %v179 = vld [vmem:[#allocation7 + $0xdc] sm:$0xf]
    %v180 = vld [vmem:[#allocation7 + $0xe0] sm:$0xf]
    %v181 = vld [vmem:[#allocation7 + $0xe4] sm:$0xf]
    %v182 = vld [vmem:[#allocation7 + $0xe8] sm:$0xf]
    %v183 = vld [vmem:[#allocation7 + $0xec] sm:$0xf]
    %v184 = vld [vmem:[#allocation7 + $0xf0] sm:$0xf]
    %v185 = vld [vmem:[#allocation7 + $0xf4] sm:$0xf]
    %v186 = vld [vmem:[#allocation7 + $0xf8] sm:$0xf]
    %v187 = vld [vmem:[#allocation7 + $0xfc] sm:$0xf]
    %v188 = vld [vmem:[#allocation7 + $0x100] sm:$0xf]
    %v189 = vld [vmem:[#allocation7 + $0x104] sm:$0xf]
    %v190 = vld [vmem:[#allocation7 + $0x108] sm:$0xf]
    %v191 = vld [vmem:[#allocation7 + $0x10c] sm:$0xf]
    %v192 = vld [vmem:[#allocation7 + $0x110] sm:$0xf]
    %v193 = vld [vmem:[#allocation7 + $0x114] sm:$0xf]
    %v194 = vld [vmem:[#allocation7 + $0x118] sm:$0xf]
    %v195 = vld [vmem:[#allocation7 + $0x11c] sm:$0xf]
    %v196 = vld [vmem:[#allocation7 + $0x120] sm:$0xf]
    %v197 = vld [vmem:[#allocation7 + $0x124] sm:$0xf]
    %v198 = vld [vmem:[#allocation7 + $0x128] sm:$0xf]
    %v199 = vld [vmem:[#allocation7 + $0x12c] sm:$0xf]
    %v200 = vld [vmem:[#allocation7 + $0x130] sm:$0xf]
    %v201 = vld [vmem:[#allocation7 + $0x134] sm:$0xf]
    %v202 = vld [vmem:[#allocation7 + $0x138] sm:$0xf]
    %v203 = vld [vmem:[#allocation7 + $0x13c] sm:$0xf]
    %v204 = vld [vmem:[#allocation7 + $0x140] sm:$0xf]
    %v205 = vld [vmem:[#allocation7 + $0x144] sm:$0xf]
    %v206 = vld [vmem:[#allocation7 + $0x148] sm:$0xf]
    %v207 = vld [vmem:[#allocation7 + $0x14c] sm:$0xf]
    %v208 = vld [vmem:[#allocation7 + $0x150] sm:$0xf]
    %v209 = vld [vmem:[#allocation7 + $0x154] sm:$0xf]
    %v210 = vld [vmem:[#allocation7 + $0x158] sm:$0xf]
    %v211 = vld [vmem:[#allocation7 + $0x15c] sm:$0xf]
    %v212 = vld [vmem:[#allocation7 + $0x160] sm:$0xf]
    %v213 = vld [vmem:[#allocation7 + $0x164] sm:$0xf]
    %v214 = vld [vmem:[#allocation7 + $0x168] sm:$0xf]
    %v215 = vld [vmem:[#allocation7 + $0x16c] sm:$0xf]
    %v216 = vld [vmem:[#allocation7 + $0x170] sm:$0xf]
    %v217 = vld [vmem:[#allocation7 + $0x174] sm:$0xf]
    %v218 = vld [vmem:[#allocation7 + $0x178] sm:$0xf]
    %v219 = vld [vmem:[#allocation7 + $0x17c] sm:$0xf]
    %v220 = vld [vmem:[#allocation7 + $0x180] sm:$0xf]
    %v221 = vld [vmem:[#allocation7 + $0x184] sm:$0xf]
    %v222 = vld [vmem:[#allocation7 + $0x188] sm:$0xf]
    %v223 = vld [vmem:[#allocation7 + $0x18c] sm:$0xf]
    %v224 = vld [vmem:[#allocation7 + $0x190] sm:$0xf]
    %v225 = vld [vmem:[#allocation7 + $0x194] sm:$0xf]
    %v226 = vld [vmem:[#allocation7 + $0x198] sm:$0xf]
    %v227 = vld [vmem:[#allocation7 + $0x19c] sm:$0xf]
    %v228 = vld [vmem:[#allocation7 + $0x1a0] sm:$0xf]
    %v229 = vld [vmem:[#allocation7 + $0x1a4] sm:$0xf]
    %v230 = vld [vmem:[#allocation7 + $0x1a8] sm:$0xf]
    %v231 = vld [vmem:[#allocation7 + $0x1ac] sm:$0xf]
    %v232 = vld [vmem:[#allocation7 + $0x1b0] sm:$0xf]
    %v233 = vld [vmem:[#allocation7 + $0x1b4] sm:$0xf]
    %v234 = vld [vmem:[#allocation7 + $0x1b8] sm:$0xf]
    %v235 = vld [vmem:[#allocation7 + $0x1bc] sm:$0xf]
    %v236 = vld [vmem:[#allocation7 + $0x1c0] sm:$0xf]
    %v237 = vld [vmem:[#allocation7 + $0x1c4] sm:$0xf]
    %v238 = vld [vmem:[#allocation7 + $0x1c8] sm:$0xf]
    %v239 = vld [vmem:[#allocation7 + $0x1cc] sm:$0xf]
    %v240 = vld [vmem:[#allocation7 + $0x1d0] sm:$0xf]
    %v241 = vld [vmem:[#allocation7 + $0x1d4] sm:$0xf]
    %v242 = vld [vmem:[#allocation7 + $0x1d8] sm:$0xf]
    %v243 = vld [vmem:[#allocation7 + $0x1dc] sm:$0xf]
    %v244 = vld [vmem:[#allocation7 + $0x1e0] sm:$0xf]
    %v245 = vld [vmem:[#allocation7 + $0x1e4] sm:$0xf]
    %v246 = vld [vmem:[#allocation7 + $0x1e8] sm:$0xf]
    %v247 = vld [vmem:[#allocation7 + $0x1ec] sm:$0xf]
    %v248 = vld [vmem:[#allocation7 + $0x1f0] sm:$0xf]
    %v249 = vld [vmem:[#allocation7 + $0x1f4] sm:$0xf]
    %v250 = vld [vmem:[#allocation7 + $0x1f8] sm:$0xf]
    %v251 = vld [vmem:[#allocation7 + $0x1fc] sm:$0xf]
    %v253 = vcombine.high %v52, %v52
    %v255 = vunpack.c.l.s4 1966171168
    %v256 = vunpack.c.0.s8 %v255
    %v257 = vlaneseq
    %v258 = vshrl.u32 %v257, 7
    %v259 = vsub.s32 %v256, %v258
    %v260 = vrot.slane %v52, %v259
    %v262 = vunpack.c.l.s4 1966171168
    %v263 = vunpack.c.0.s8 %v262
    %v264 = vlaneseq
    %v265 = vshrl.u32 %v264, 7
    %v266 = vsub.s32 %v263, %v265
    %v267 = vrot.slane %v253, %v266
    %v268 = vcombine.high %v260, %v260
    %v269 = vcombine.high %v267, %v267
    %v271 = vunpack.c.l.s4 1966171168
    %v272 = vunpack.c.0.s8 %v271
    %v273 = vlaneseq
    %v274 = vshrl.u32 %v273, 7
    %v275 = vsub.s32 %v272, %v274
    %v276 = vrot.slane %v260, %v275
    %v278 = vunpack.c.l.s4 1966171168
    %v279 = vunpack.c.0.s8 %v278
    %v280 = vlaneseq
    %v281 = vshrl.u32 %v280, 7
    %v282 = vsub.s32 %v279, %v281
    %v283 = vrot.slane %v267, %v282
    %v285 = vunpack.c.l.s4 1966171168
    %v286 = vunpack.c.0.s8 %v285
    %v287 = vlaneseq
    %v288 = vshrl.u32 %v287, 7
    %v289 = vsub.s32 %v286, %v288
    %v290 = vrot.slane %v268, %v289
    %v292 = vunpack.c.l.s4 1966171168
    %v293 = vunpack.c.0.s8 %v292
    %v294 = vlaneseq
    %v295 = vshrl.u32 %v294, 7
    %v296 = vsub.s32 %v293, %v295
    %v297 = vrot.slane %v269, %v296
    %v298 = vcombine.high %v276, %v276
    %v299 = vcombine.high %v283, %v283
    %v300 = vcombine.high %v290, %v290
    %v301 = vcombine.high %v297, %v297
    %v438 = vunpack.c.l.b16 %v124
    %v439 = vunpack.c.l.b16 %v125
    %v440 = vunpack.c.l.b16 %v126
    %v441 = vunpack.c.l.b16 %v127
    %v442 = vunpack.c.l.b16 %v128
    %v443 = vunpack.c.l.b16 %v129
    %v444 = vunpack.c.l.b16 %v130
    %v445 = vunpack.c.l.b16 %v131
    %v446 = vunpack.c.l.b16 %v132
    %v447 = vunpack.c.l.b16 %v133
    %v448 = vunpack.c.l.b16 %v134
    %v449 = vunpack.c.l.b16 %v135
    %v450 = vunpack.c.l.b16 %v136
    %v451 = vunpack.c.l.b16 %v137
    %v452 = vunpack.c.l.b16 %v138
    %v453 = vunpack.c.l.b16 %v139
    %v454 = vunpack.c.l.b16 %v140
    %v455 = vunpack.c.l.b16 %v141
    %v456 = vunpack.c.l.b16 %v142
    %v457 = vunpack.c.l.b16 %v143
    %v458 = vunpack.c.l.b16 %v144
    %v459 = vunpack.c.l.b16 %v145
    %v460 = vunpack.c.l.b16 %v146
    %v461 = vunpack.c.l.b16 %v147
    %v462 = vunpack.c.l.b16 %v148
    %v463 = vunpack.c.l.b16 %v149
    %v464 = vunpack.c.l.b16 %v150
    %v465 = vunpack.c.l.b16 %v151
    %v466 = vunpack.c.l.b16 %v152
    %v467 = vunpack.c.l.b16 %v153
    %v468 = vunpack.c.l.b16 %v154
    %v469 = vunpack.c.l.b16 %v155
    %v470 = vunpack.c.l.b16 %v156
    %v471 = vunpack.c.l.b16 %v157
    %v472 = vunpack.c.l.b16 %v158
    %v473 = vunpack.c.l.b16 %v159
    %v474 = vunpack.c.l.b16 %v160
    %v475 = vunpack.c.l.b16 %v161
    %v476 = vunpack.c.l.b16 %v162
    %v477 = vunpack.c.l.b16 %v163
    %v478 = vunpack.c.l.b16 %v164
    %v479 = vunpack.c.l.b16 %v165
    %v480 = vunpack.c.l.b16 %v166
    %v481 = vunpack.c.l.b16 %v167
    %v482 = vunpack.c.l.b16 %v168
    %v483 = vunpack.c.l.b16 %v169
    %v484 = vunpack.c.l.b16 %v170
    %v485 = vunpack.c.l.b16 %v171
    %v486 = vunpack.c.l.b16 %v172
    %v487 = vunpack.c.l.b16 %v173
    %v488 = vunpack.c.l.b16 %v174
    %v489 = vunpack.c.l.b16 %v175
    %v490 = vunpack.c.l.b16 %v176
    %v491 = vunpack.c.l.b16 %v177
    %v492 = vunpack.c.l.b16 %v178
    %v493 = vunpack.c.l.b16 %v179
    %v494 = vunpack.c.l.b16 %v180
    %v495 = vunpack.c.l.b16 %v181
    %v496 = vunpack.c.l.b16 %v182
    %v497 = vunpack.c.l.b16 %v183
    %v498 = vunpack.c.l.b16 %v184
    %v499 = vunpack.c.l.b16 %v185
    %v500 = vunpack.c.l.b16 %v186
    %v501 = vunpack.c.l.b16 %v187
    %v502 = vunpack.c.l.b16 %v188
    %v503 = vunpack.c.l.b16 %v189
    %v504 = vunpack.c.l.b16 %v190
    %v505 = vunpack.c.l.b16 %v191
    %v506 = vunpack.c.l.b16 %v192
    %v507 = vunpack.c.l.b16 %v193
    %v508 = vunpack.c.l.b16 %v194
    %v509 = vunpack.c.l.b16 %v195
    %v510 = vunpack.c.l.b16 %v196
    %v511 = vunpack.c.l.b16 %v197
    %v512 = vunpack.c.l.b16 %v198
    %v513 = vunpack.c.l.b16 %v199
    %v514 = vunpack.c.l.b16 %v200
    %v515 = vunpack.c.l.b16 %v201
    %v516 = vunpack.c.l.b16 %v202
    %v517 = vunpack.c.l.b16 %v203
    %v518 = vunpack.c.l.b16 %v204
    %v519 = vunpack.c.l.b16 %v205
    %v520 = vunpack.c.l.b16 %v206
    %v521 = vunpack.c.l.b16 %v207
    %v522 = vunpack.c.l.b16 %v208
    %v523 = vunpack.c.l.b16 %v209
    %v524 = vunpack.c.l.b16 %v210
    %v525 = vunpack.c.l.b16 %v211
    %v526 = vunpack.c.l.b16 %v212
    %v527 = vunpack.c.l.b16 %v213
    %v528 = vunpack.c.l.b16 %v214
    %v529 = vunpack.c.l.b16 %v215
    %v530 = vunpack.c.l.b16 %v216
    %v531 = vunpack.c.l.b16 %v217
    %v532 = vunpack.c.l.b16 %v218
    %v533 = vunpack.c.l.b16 %v219
    %v534 = vunpack.c.l.b16 %v220
    %v535 = vunpack.c.l.b16 %v221
    %v536 = vunpack.c.l.b16 %v222
    %v537 = vunpack.c.l.b16 %v223
    %v538 = vunpack.c.l.b16 %v224
    %v539 = vunpack.c.l.b16 %v225
    %v540 = vunpack.c.l.b16 %v226
    %v541 = vunpack.c.l.b16 %v227
    %v542 = vunpack.c.l.b16 %v228
    %v543 = vunpack.c.l.b16 %v229
    %v544 = vunpack.c.l.b16 %v230
    %v545 = vunpack.c.l.b16 %v231
    %v546 = vunpack.c.l.b16 %v232
    %v547 = vunpack.c.l.b16 %v233
    %v548 = vunpack.c.l.b16 %v234
    %v549 = vunpack.c.l.b16 %v235
    %v550 = vunpack.c.l.b16 %v236
    %v551 = vunpack.c.l.b16 %v237
    %v552 = vunpack.c.l.b16 %v238
    %v553 = vunpack.c.l.b16 %v239
    %v554 = vunpack.c.l.b16 %v240
    %v555 = vunpack.c.l.b16 %v241
    %v556 = vunpack.c.l.b16 %v242
    %v557 = vunpack.c.l.b16 %v243
    %v558 = vunpack.c.l.b16 %v244
    %v559 = vunpack.c.l.b16 %v245
    %v560 = vunpack.c.l.b16 %v246
    %v561 = vunpack.c.l.b16 %v247
    %v562 = vunpack.c.l.b16 %v248
    %v563 = vunpack.c.l.b16 %v249
    %v564 = vunpack.c.l.b16 %v250
    %v565 = vunpack.c.l.b16 %v251
    %v566 = vpack.c.b16 %v439, %v438
    %v567 = vpack.c.b16 %v441, %v440
    %v568 = vpack.c.b16 %v443, %v442
    %v569 = vpack.c.b16 %v445, %v444
    %v570 = vpack.c.b16 %v447, %v446
    %v571 = vpack.c.b16 %v449, %v448
    %v572 = vpack.c.b16 %v451, %v450
    %v573 = vpack.c.b16 %v453, %v452
    %v574 = vpack.c.b16 %v455, %v454
    %v575 = vpack.c.b16 %v457, %v456
    %v576 = vpack.c.b16 %v459, %v458
    %v577 = vpack.c.b16 %v461, %v460
    %v578 = vpack.c.b16 %v463, %v462
    %v579 = vpack.c.b16 %v465, %v464
    %v580 = vpack.c.b16 %v467, %v466
    %v581 = vpack.c.b16 %v469, %v468
    %v582 = vpack.c.b16 %v471, %v470
    %v583 = vpack.c.b16 %v473, %v472
    %v584 = vpack.c.b16 %v475, %v474
    %v585 = vpack.c.b16 %v477, %v476
    %v586 = vpack.c.b16 %v479, %v478
    %v587 = vpack.c.b16 %v481, %v480
    %v588 = vpack.c.b16 %v483, %v482
    %v589 = vpack.c.b16 %v485, %v484
    %v590 = vpack.c.b16 %v487, %v486
    %v591 = vpack.c.b16 %v489, %v488
    %v592 = vpack.c.b16 %v491, %v490
    %v593 = vpack.c.b16 %v493, %v492
    %v594 = vpack.c.b16 %v495, %v494
    %v595 = vpack.c.b16 %v497, %v496
    %v596 = vpack.c.b16 %v499, %v498
    %v597 = vpack.c.b16 %v501, %v500
    %v598 = vpack.c.b16 %v503, %v502
    %v599 = vpack.c.b16 %v505, %v504
    %v600 = vpack.c.b16 %v507, %v506
    %v601 = vpack.c.b16 %v509, %v508
    %v602 = vpack.c.b16 %v511, %v510
    %v603 = vpack.c.b16 %v513, %v512
    %v604 = vpack.c.b16 %v515, %v514
    %v605 = vpack.c.b16 %v517, %v516
    %v606 = vpack.c.b16 %v519, %v518
    %v607 = vpack.c.b16 %v521, %v520
    %v608 = vpack.c.b16 %v523, %v522
    %v609 = vpack.c.b16 %v525, %v524
    %v610 = vpack.c.b16 %v527, %v526
    %v611 = vpack.c.b16 %v529, %v528
    %v612 = vpack.c.b16 %v531, %v530
    %v613 = vpack.c.b16 %v533, %v532
    %v614 = vpack.c.b16 %v535, %v534
    %v615 = vpack.c.b16 %v537, %v536
    %v616 = vpack.c.b16 %v539, %v538
    %v617 = vpack.c.b16 %v541, %v540
    %v618 = vpack.c.b16 %v543, %v542
    %v619 = vpack.c.b16 %v545, %v544
    %v620 = vpack.c.b16 %v547, %v546
    %v621 = vpack.c.b16 %v549, %v548
    %v622 = vpack.c.b16 %v551, %v550
    %v623 = vpack.c.b16 %v553, %v552
    %v624 = vpack.c.b16 %v555, %v554
    %v625 = vpack.c.b16 %v557, %v556
    %v626 = vpack.c.b16 %v559, %v558
    %v627 = vpack.c.b16 %v561, %v560
    %v628 = vpack.c.b16 %v563, %v562
    %v629 = vpack.c.b16 %v565, %v564
    %694 = vmatprep.subr.bf16.mxu0 0
    %695 = vmatpush1.bf16.msra.mxu0 %v566
    %696 = vmatprep.subr.bf16.mxu0 0
    %697 = vmatpush1.bf16.msra.mxu0 %v567
    %698 = vmatprep.subr.bf16.mxu0 0
    %699 = vmatpush1.bf16.msra.mxu0 %v568
    %700 = vmatprep.subr.bf16.mxu0 0
    %701 = vmatpush1.bf16.msra.mxu0 %v569
    %702 = vmatprep.subr.bf16.mxu0 0
    %703 = vmatpush1.bf16.msra.mxu0 %v570
    %704 = vmatprep.subr.bf16.mxu0 0
    %705 = vmatpush1.bf16.msra.mxu0 %v571
    %706 = vmatprep.subr.bf16.mxu0 0
    %707 = vmatpush1.bf16.msra.mxu0 %v572
    %708 = vmatprep.subr.bf16.mxu0 0
    %709 = vmatpush1.bf16.msra.mxu0 %v573
    %710 = vmatprep.subr.bf16.mxu0 0
    %711 = vmatpush1.bf16.msra.mxu0 %v574
    %712 = vmatprep.subr.bf16.mxu0 0
    %713 = vmatpush1.bf16.msra.mxu0 %v575
    %714 = vmatprep.subr.bf16.mxu0 0
    %715 = vmatpush1.bf16.msra.mxu0 %v576
    %716 = vmatprep.subr.bf16.mxu0 0
    %717 = vmatpush1.bf16.msra.mxu0 %v577
    %718 = vmatprep.subr.bf16.mxu0 0
    %719 = vmatpush1.bf16.msra.mxu0 %v578
    %720 = vmatprep.subr.bf16.mxu0 0
    %721 = vmatpush1.bf16.msra.mxu0 %v579
    %722 = vmatprep.subr.bf16.mxu0 0
    %723 = vmatpush1.bf16.msra.mxu0 %v580
    %724 = vmatprep.subr.bf16.mxu0 0
    %725 = vmatpush1.bf16.msra.mxu0 %v581
    %726 = vmatprep.mubr.bf16.mxu0 %v290
    %727 = vmatmul.mubr.bf16.gmra.mrb[0].mxu0 %v276
    %v728 = vpop.f32.mrb[0].mxu0
    %v729 = vadd.f32 0.0, %v728
    %v730 = vpop.f32.mrb[0].mxu0
    %v731 = vpop.f32.mrb[0].mxu0
    %v732 = vpop.f32.mrb[0].mxu0
    %733 = vdwg.mxu0
    %734 = vmatprep.subr.bf16.mxu0 0
    %735 = vmatpush1.bf16.msra.mxu0 %v582
    %736 = vmatprep.subr.bf16.mxu0 0
    %737 = vmatpush1.bf16.msra.mxu0 %v583
    %738 = vmatprep.subr.bf16.mxu0 0
    %739 = vmatpush1.bf16.msra.mxu0 %v584
    %740 = vmatprep.subr.bf16.mxu0 0
    %741 = vmatpush1.bf16.msra.mxu0 %v585
    %742 = vmatprep.subr.bf16.mxu0 0
    %743 = vmatpush1.bf16.msra.mxu0 %v586
    %744 = vmatprep.subr.bf16.mxu0 0
    %745 = vmatpush1.bf16.msra.mxu0 %v587
    %746 = vmatprep.subr.bf16.mxu0 0
    %747 = vmatpush1.bf16.msra.mxu0 %v588
    %748 = vmatprep.subr.bf16.mxu0 0
    %749 = vmatpush1.bf16.msra.mxu0 %v589
    %750 = vmatprep.subr.bf16.mxu0 0
    %751 = vmatpush1.bf16.msra.mxu0 %v590
    %752 = vmatprep.subr.bf16.mxu0 0
    %753 = vmatpush1.bf16.msra.mxu0 %v591
    %754 = vmatprep.subr.bf16.mxu0 0
    %755 = vmatpush1.bf16.msra.mxu0 %v592
    %756 = vmatprep.subr.bf16.mxu0 0
    %757 = vmatpush1.bf16.msra.mxu0 %v593
    %758 = vmatprep.subr.bf16.mxu0 0
    %759 = vmatpush1.bf16.msra.mxu0 %v594
    %760 = vmatprep.subr.bf16.mxu0 0
    %761 = vmatpush1.bf16.msra.mxu0 %v595
    %762 = vmatprep.subr.bf16.mxu0 0
    %763 = vmatpush1.bf16.msra.mxu0 %v596
    %764 = vmatprep.subr.bf16.mxu0 0
    %765 = vmatpush1.bf16.msra.mxu0 %v597
    %766 = vmatprep.mubr.bf16.mxu0 %v300
    %767 = vmatmul.mubr.bf16.gmra.mrb[0].mxu0 %v298
    %v768 = vpop.f32.mrb[0].mxu0
    %v769 = vadd.f32 %v729, %v768
    %v770 = vpop.f32.mrb[0].mxu0
    %v771 = vpop.f32.mrb[0].mxu0
    %v772 = vpop.f32.mrb[0].mxu0
    %773 = vdwg.mxu0
    %774 = vmatprep.subr.bf16.mxu0 0
    %775 = vmatpush1.bf16.msra.mxu0 %v598
    %776 = vmatprep.subr.bf16.mxu0 0
    %777 = vmatpush1.bf16.msra.mxu0 %v599
    %778 = vmatprep.subr.bf16.mxu0 0
    %779 = vmatpush1.bf16.msra.mxu0 %v600
    %780 = vmatprep.subr.bf16.mxu0 0
    %781 = vmatpush1.bf16.msra.mxu0 %v601
    %782 = vmatprep.subr.bf16.mxu0 0
    %783 = vmatpush1.bf16.msra.mxu0 %v602
    %784 = vmatprep.subr.bf16.mxu0 0
    %785 = vmatpush1.bf16.msra.mxu0 %v603
    %786 = vmatprep.subr.bf16.mxu0 0
    %787 = vmatpush1.bf16.msra.mxu0 %v604
    %788 = vmatprep.subr.bf16.mxu0 0
    %789 = vmatpush1.bf16.msra.mxu0 %v605
    %790 = vmatprep.subr.bf16.mxu0 0
    %791 = vmatpush1.bf16.msra.mxu0 %v606
    %792 = vmatprep.subr.bf16.mxu0 0
    %793 = vmatpush1.bf16.msra.mxu0 %v607
    %794 = vmatprep.subr.bf16.mxu0 0
    %795 = vmatpush1.bf16.msra.mxu0 %v608
    %796 = vmatprep.subr.bf16.mxu0 0
    %797 = vmatpush1.bf16.msra.mxu0 %v609
    %798 = vmatprep.subr.bf16.mxu0 0
    %799 = vmatpush1.bf16.msra.mxu0 %v610
    %800 = vmatprep.subr.bf16.mxu0 0
    %801 = vmatpush1.bf16.msra.mxu0 %v611
    %802 = vmatprep.subr.bf16.mxu0 0
    %803 = vmatpush1.bf16.msra.mxu0 %v612
    %804 = vmatprep.subr.bf16.mxu0 0
    %805 = vmatpush1.bf16.msra.mxu0 %v613
    %806 = vmatprep.mubr.bf16.mxu0 %v297
    %807 = vmatmul.mubr.bf16.gmra.mrb[0].mxu0 %v283
    %v808 = vpop.f32.mrb[0].mxu0
    %v809 = vadd.f32 %v769, %v808
    %v810 = vpop.f32.mrb[0].mxu0
    %v811 = vpop.f32.mrb[0].mxu0
    %v812 = vpop.f32.mrb[0].mxu0
    %813 = vdwg.mxu0
    %814 = vmatprep.subr.bf16.mxu0 0
    %815 = vmatpush1.bf16.msra.mxu0 %v614
    %816 = vmatprep.subr.bf16.mxu0 0
    %817 = vmatpush1.bf16.msra.mxu0 %v615
    %818 = vmatprep.subr.bf16.mxu0 0
    %819 = vmatpush1.bf16.msra.mxu0 %v616
    %820 = vmatprep.subr.bf16.mxu0 0
    %821 = vmatpush1.bf16.msra.mxu0 %v617
    %822 = vmatprep.subr.bf16.mxu0 0
    %823 = vmatpush1.bf16.msra.mxu0 %v618
    %824 = vmatprep.subr.bf16.mxu0 0
    %825 = vmatpush1.bf16.msra.mxu0 %v619
    %826 = vmatprep.subr.bf16.mxu0 0
    %827 = vmatpush1.bf16.msra.mxu0 %v620
    %828 = vmatprep.subr.bf16.mxu0 0
    %829 = vmatpush1.bf16.msra.mxu0 %v621
    %830 = vmatprep.subr.bf16.mxu0 0
    %831 = vmatpush1.bf16.msra.mxu0 %v622
    %832 = vmatprep.subr.bf16.mxu0 0
    %833 = vmatpush1.bf16.msra.mxu0 %v623
    %834 = vmatprep.subr.bf16.mxu0 0
    %835 = vmatpush1.bf16.msra.mxu0 %v624
    %836 = vmatprep.subr.bf16.mxu0 0
    %837 = vmatpush1.bf16.msra.mxu0 %v625
    %838 = vmatprep.subr.bf16.mxu0 0
    %839 = vmatpush1.bf16.msra.mxu0 %v626
    %840 = vmatprep.subr.bf16.mxu0 0
    %841 = vmatpush1.bf16.msra.mxu0 %v627
    %842 = vmatprep.subr.bf16.mxu0 0
    %843 = vmatpush1.bf16.msra.mxu0 %v628
    %844 = vmatprep.subr.bf16.mxu0 0
    %845 = vmatpush1.bf16.msra.mxu0 %v629
    %846 = vmatprep.mubr.bf16.mxu0 %v301
    %847 = vmatmul.mubr.bf16.gmra.mrb[0].mxu0 %v299
    %v848 = vpop.f32.mrb[0].mxu0
    %v849 = vadd.f32 %v809, %v848
    %v850 = vpop.f32.mrb[0].mxu0
    %v851 = vpop.f32.mrb[0].mxu0
    %v852 = vpop.f32.mrb[0].mxu0
    %853 = vdwg.mxu0
    %v854 = vadd.f32 %v123, %v849
    %855 = vst [vmem:[#allocation2] sm:$0x3] %v854
    // Predicated region
    $region30: #{tpu_custom_call.1} parent=1 // pred_check
      %p856 = pneg %p45
    $region31: #{tpu_custom_call.1} parent=1 // pred_check_branch
      %858 = sbr.rel (%p856) target = $region33
    $region32: #{tpu_custom_call.1} parent=1 // pred_region
      %v859 = vld [vmem:[#allocation3] sm:$0x3]
      %v860 = vmax.f32 %v859, 1e-24
      %v861 = vrsqrt.pop %v860
      %v862 = vld [vmem:[%s2] sm:$0x1]
      %v863 = vsub.f32 %v861, 1.0
      %v865 = vlaneseq
      %v866 = vshrl.u32 %v865, 7
      %v867 = vsub.s32 0, %v866
      %v868 = vrot.slane %v862, %v867
      %871 = vset.pattern.permute.xlu0 0
      %872 = vperm.xlu0 %871, %v863
      %v873 = vpop.permute.xlu0 %872
      %v875 = vmul.f32 %v868, %v873
      %v876 = vadd.f32 %v875, 1.0
      %v877 = vld [vmem:[#allocation2] sm:$0x3]
      %v878 = vmul.f32 %v877, %v876
      %v879 = vld [vmem:[%s3] sm:$0x1]
      %v881 = vlaneseq
      %v882 = vshrl.u32 %v881, 7
      %v883 = vsub.s32 0, %v882
      %v884 = vrot.slane %v879, %v883
      %v886 = vadd.f32 %v878, %v884
      %887 = vst [vmem:[#allocation9] sm:$0x3] %v886
    $region33: #{tpu_custom_call.1} parent=1 // pred_fallthru
      _
    // Predicated region
    $region34: #{tpu_custom_call.1} parent=1 // pred_check
      _
    $region35: #{tpu_custom_call.1} parent=1 // pred_check_branch
      %889 = sbr.rel (0) target = $region37
    $region36: #{tpu_custom_call.1} parent=1 // pred_region
      %s891 = ssub.s32 32, 32
      %892 = vsyncadd [#allocation6], %s891
      %s894 = sshll.u32 [#allocation9], 4
      %s895 = int_to_ptr.vmem [resolvable:$true] %s894
      %897 = dma.vmem_to_hbm [thread:$0]  %s895, 32, %s4, [#allocation6]
    $region37: #{tpu_custom_call.1} parent=1 // pred_fallthru
      _
    // Predicated region
    $region38: #{tpu_custom_call.1} parent=1 // pred_check
      _
    $region39: #{tpu_custom_call.1} parent=1 // pred_check_branch
      %899 = sbr.rel (0) target = $region41
    $region40: #{tpu_custom_call.1} parent=1 // pred_region
      %900 = dma.done [#allocation6], 32
    $region41: #{tpu_custom_call.1} parent=1 // pred_fallthru
      _
    %901 = vsyncpa [#allocation5], 1
    %902 = vsyncpa [#allocation8], 1
    %903 = vsyncpa [#allocation6], 1

// kernel: tpu_custom_call.1
$region0: #{tpu_custom_call.1}
  #allocation0 [shape = 'u32[]', space=smem, size = 0x4, offset = 0x4, fixed_abs, tag = 'smem constant byte address 0x4 - core index']
  #allocation1 [shape = 'u32[144,128]{1,0:T(1,128)}', space=vmem, size = 0x12000, scoped, tag = 'internal scratch']
  #allocation2 [shape = 'f32[2,128]{1,0:T(2,128)}', space=vmem, size = 0x400, scoped, tag = 'scratch operand']
  #allocation3 [shape = 'f32[2,1]{1,0:T(2,128)}', space=vmem, size = 0x400, scoped, tag = 'scratch operand']
  %s0 = inlined_call_operand.hbm [shape: bf16[2,1024], index: 0, kind: input, shape index: {}]
  %s1 = inlined_call_operand.hbm [shape: bf16[1024,128], index: 1, kind: input, shape index: {}]
  %s2 = inlined_call_operand.vmem [shape: f32[1,128], index: 2, kind: input, shape index: {}]
  %s3 = inlined_call_operand.vmem [shape: f32[1,128], index: 3, kind: input, shape index: {}]
  %s4 = inlined_call_operand.hbm [shape: f32[2,128], index: 4, kind: output, shape index: {}]
  %s5 = sld [smem:[#allocation0]]
  $region42: #{tpu_custom_call.1} parent=0
    _
  %s7 = ssub.s32 1, %s5
  %s8 = scalar_select 0, %s7, %s5
  $region1: #{tpu_custom_call.1} parent=0
    #allocation4 [shape = 'u8[4096]{0}', space=vmem, size = 0x1000, scoped, tag = 'input window, operand 0, single buffered']
    #allocation5 [shape = 's32[1]{0}', space=sflag, size = 0x4, scoped, tag = 'scoped memory for tpu_custom_call.1']
    #allocation6 [shape = 's32[1]{0}', space=sflag, size = 0x4, scoped, tag = 'scoped memory for tpu_custom_call.1']
    #allocation7 [shape = 'u8[262144]{0}', space=vmem, size = 0x40000, scoped, tag = 'input window, operand 1, single buffered']
    #allocation8 [shape = 's32[1]{0}', space=sflag, size = 0x4, scoped, tag = 'scoped memory for tpu_custom_call.1']
    #allocation9 [shape = 'u8[1024]{0}', space=vmem, size = 0x400, scoped, tag = 'output window, operand 0, single buffered']
    %9 = vsyncpa [#allocation5], 0
    %10 = vsyncpa [#allocation8], 0
    %11 = vsyncpa [#allocation6], 0
    // Predicated region
    $region2: #{tpu_custom_call.1} parent=1 // pred_check
      _
    $region3: #{tpu_custom_call.1} parent=1 // pred_check_branch
      %13 = sbr.rel (0) target = $region5
    $region4: #{tpu_custom_call.1} parent=1 // pred_region
      %s15 = ssub.s32 128, 128
      %16 = vsyncadd [#allocation5], %s15
      %s18 = sshll.u32 [#allocation4], 4
      %s19 = int_to_ptr.vmem [resolvable:$true] %s18
      %21 = dma.hbm_to_vmem [thread:$0]  %s0, 128, %s19, [#allocation5]
    $region5: #{tpu_custom_call.1} parent=1 // pred_fallthru
      _
    // Predicated region
    $region6: #{tpu_custom_call.1} parent=1 // pred_check
      _
    $region7: #{tpu_custom_call.1} parent=1 // pred_check_branch
      %23 = sbr.rel (0) target = $region9
    $region8: #{tpu_custom_call.1} parent=1 // pred_region
      %s25 = ssub.s32 8192, 8192
      %26 = vsyncadd [#allocation8], %s25
      %s27 = sshll.u32 [#allocation7], 4
      %s28 = int_to_ptr.vmem [resolvable:$true] %s27
      %33 = dma.hbm_to_vmem [thread:$0]  %s1, 8192, %s28, [#allocation8], 64, 64, 4
    $region9: #{tpu_custom_call.1} parent=1 // pred_fallthru
      _
    // Predicated region
    $region10: #{tpu_custom_call.1} parent=1 // pred_check
      _
    $region11: #{tpu_custom_call.1} parent=1 // pred_check_branch
      %35 = sbr.rel (0) target = $region13
    $region12: #{tpu_custom_call.1} parent=1 // pred_region
      _
    $region13: #{tpu_custom_call.1} parent=1 // pred_fallthru
      _
    // Predicated region
    $region14: #{tpu_custom_call.1} parent=1 // pred_check
      _
    $region15: #{tpu_custom_call.1} parent=1 // pred_check_branch
      %37 = sbr.rel (0) target = $region17
    $region16: #{tpu_custom_call.1} parent=1 // pred_region
      _
    $region17: #{tpu_custom_call.1} parent=1 // pred_fallthru
      _
    // Predicated region
    $region18: #{tpu_custom_call.1} parent=1 // pred_check
      _
    $region19: #{tpu_custom_call.1} parent=1 // pred_check_branch
      %39 = sbr.rel (0) target = $region21
    $region20: #{tpu_custom_call.1} parent=1 // pred_region
      %40 = dma.done [#allocation5], 128
    $region21: #{tpu_custom_call.1} parent=1 // pred_fallthru
      _
    // Predicated region
    $region22: #{tpu_custom_call.1} parent=1 // pred_check
      _
    $region23: #{tpu_custom_call.1} parent=1 // pred_check_branch
      %42 = sbr.rel (0) target = $region25
    $region24: #{tpu_custom_call.1} parent=1 // pred_region
      %43 = dma.done [#allocation8], 8192
    $region25: #{tpu_custom_call.1} parent=1 // pred_fallthru
      _
    %p45 = scmp.eq.s32.totalorder 0, 0
    // Predicated region
    $region26: #{tpu_custom_call.1} parent=1 // pred_check
      %p46 = pneg %p45
    $region27: #{tpu_custom_call.1} parent=1 // pred_check_branch
      %48 = sbr.rel (%p46) target = $region29
    $region28: #{tpu_custom_call.1} parent=1 // pred_region
      %49 = vst [vmem:[#allocation2] sm:$0x3] 0.0
      %vm50 = vcmask 1024
      %51 = vst.msk [vmem:[#allocation3] sm:$0x3] %vm50, 0.0
    $region29: #{tpu_custom_call.1} parent=1 // pred_fallthru
      _
    %v52 = vld [vmem:[#allocation4] sm:$0xff]
    %v53 = vunpack.c.l.bf16 %v52
    %v54 = vunpack.c.h.bf16 %v52
    %v55 = vld [vmem:[#allocation3] sm:$0x3]
    %v56 = vmul.f32 %v53, %v53
    %v57 = vmul.f32 %v54, %v54
    %v60 = vcombine.high %v56, %v56
    %v62 = vunpack.c.l.s4 1983009808
    %v63 = vunpack.c.0.s8 %v62
    %v64 = vlaneseq
    %v65 = vshrl.u32 %v64, 7
    %v66 = vsub.s32 %v63, %v65
    %v67 = vrot.slane %v56, %v66
    %v69 = vunpack.c.l.s4 1983009808
    %v70 = vunpack.c.0.s8 %v69
    %v71 = vlaneseq
    %v72 = vshrl.u32 %v71, 7
    %v73 = vsub.s32 %v70, %v72
    %v74 = vrot.slane %v60, %v73
    %v75 = vcombine.high %v67, %v67
    %v76 = vcombine.high %v74, %v74
    %v77 = vcombine.high %v57, %v57
    %v79 = vunpack.c.l.s4 1983009808
    %v80 = vunpack.c.0.s8 %v79
    %v81 = vlaneseq
    %v82 = vshrl.u32 %v81, 7
    %v83 = vsub.s32 %v80, %v82
    %v84 = vrot.slane %v57, %v83
    %v86 = vunpack.c.l.s4 1983009808
    %v87 = vunpack.c.0.s8 %v86
    %v88 = vlaneseq
    %v89 = vshrl.u32 %v88, 7
    %v90 = vsub.s32 %v87, %v89
    %v91 = vrot.slane %v77, %v90
    %v92 = vcombine.high %v84, %v84
    %v93 = vcombine.high %v91, %v91
    %vm102 = vcmask 1041408
    %v103 = vsel %vm102, %v67, 0.0
    %v104 = vsel %vm102, %v75, 0.0
    %v105 = vadd.f32 %v103, %v104
    %v106 = vsel %vm102, %v74, 0.0
    %v107 = vadd.f32 %v105, %v106
    %v108 = vsel %vm102, %v76, 0.0
    %v109 = vadd.f32 %v107, %v108
    %v110 = vsel %vm102, %v84, 0.0
    %v111 = vadd.f32 %v109, %v110
    %v112 = vsel %vm102, %v92, 0.0
    %v113 = vadd.f32 %v111, %v112
    %v114 = vsel %vm102, %v91, 0.0
    %v115 = vadd.f32 %v113, %v114
    %v116 = vsel %vm102, %v93, 0.0
    %v117 = vadd.f32 %v115, %v116
    %118 = vadd.xlane.f32.xlu0 %v117
    %v119 = vpop.xlane.xlu0 %118
    %v120 = vadd.f32 %v55, %v119
    %vm121 = vcmask 1024
    %122 = vst.msk [vmem:[#allocation3] sm:$0x3] %vm121, %v120
    %v123 = vld [vmem:[#allocation2] sm:$0x3]
    %v124 = vld [vmem:[#allocation7] sm:$0xf]
    %v125 = vld [vmem:[#allocation7 + $0x4] sm:$0xf]
    %v126 = vld [vmem:[#allocation7 + $0x8] sm:$0xf]
    %v127 = vld [vmem:[#allocation7 + $0xc] sm:$0xf]
    %v128 = vld [vmem:[#allocation7 + $0x10] sm:$0xf]
    %v129 = vld [vmem:[#allocation7 + $0x14] sm:$0xf]
    %v130 = vld [vmem:[#allocation7 + $0x18] sm:$0xf]
    %v131 = vld [vmem:[#allocation7 + $0x1c] sm:$0xf]
    %v132 = vld [vmem:[#allocation7 + $0x20] sm:$0xf]
    %v133 = vld [vmem:[#allocation7 + $0x24] sm:$0xf]
    %v134 = vld [vmem:[#allocation7 + $0x28] sm:$0xf]
    %v135 = vld [vmem:[#allocation7 + $0x2c] sm:$0xf]
    %v136 = vld [vmem:[#allocation7 + $0x30] sm:$0xf]
    %v137 = vld [vmem:[#allocation7 + $0x34] sm:$0xf]
    %v138 = vld [vmem:[#allocation7 + $0x38] sm:$0xf]
    %v139 = vld [vmem:[#allocation7 + $0x3c] sm:$0xf]
    %v140 = vld [vmem:[#allocation7 + $0x40] sm:$0xf]
    %v141 = vld [vmem:[#allocation7 + $0x44] sm:$0xf]
    %v142 = vld [vmem:[#allocation7 + $0x48] sm:$0xf]
    %v143 = vld [vmem:[#allocation7 + $0x4c] sm:$0xf]
    %v144 = vld [vmem:[#allocation7 + $0x50] sm:$0xf]
    %v145 = vld [vmem:[#allocation7 + $0x54] sm:$0xf]
    %v146 = vld [vmem:[#allocation7 + $0x58] sm:$0xf]
    %v147 = vld [vmem:[#allocation7 + $0x5c] sm:$0xf]
    %v148 = vld [vmem:[#allocation7 + $0x60] sm:$0xf]
    %v149 = vld [vmem:[#allocation7 + $0x64] sm:$0xf]
    %v150 = vld [vmem:[#allocation7 + $0x68] sm:$0xf]
    %v151 = vld [vmem:[#allocation7 + $0x6c] sm:$0xf]
    %v152 = vld [vmem:[#allocation7 + $0x70] sm:$0xf]
    %v153 = vld [vmem:[#allocation7 + $0x74] sm:$0xf]
    %v154 = vld [vmem:[#allocation7 + $0x78] sm:$0xf]
    %v155 = vld [vmem:[#allocation7 + $0x7c] sm:$0xf]
    %v156 = vld [vmem:[#allocation7 + $0x80] sm:$0xf]
    %v157 = vld [vmem:[#allocation7 + $0x84] sm:$0xf]
    %v158 = vld [vmem:[#allocation7 + $0x88] sm:$0xf]
    %v159 = vld [vmem:[#allocation7 + $0x8c] sm:$0xf]
    %v160 = vld [vmem:[#allocation7 + $0x90] sm:$0xf]
    %v161 = vld [vmem:[#allocation7 + $0x94] sm:$0xf]
    %v162 = vld [vmem:[#allocation7 + $0x98] sm:$0xf]
    %v163 = vld [vmem:[#allocation7 + $0x9c] sm:$0xf]
    %v164 = vld [vmem:[#allocation7 + $0xa0] sm:$0xf]
    %v165 = vld [vmem:[#allocation7 + $0xa4] sm:$0xf]
    %v166 = vld [vmem:[#allocation7 + $0xa8] sm:$0xf]
    %v167 = vld [vmem:[#allocation7 + $0xac] sm:$0xf]
    %v168 = vld [vmem:[#allocation7 + $0xb0] sm:$0xf]
    %v169 = vld [vmem:[#allocation7 + $0xb4] sm:$0xf]
    %v170 = vld [vmem:[#allocation7 + $0xb8] sm:$0xf]
    %v171 = vld [vmem:[#allocation7 + $0xbc] sm:$0xf]
    %v172 = vld [vmem:[#allocation7 + $0xc0] sm:$0xf]
    %v173 = vld [vmem:[#allocation7 + $0xc4] sm:$0xf]
    %v174 = vld [vmem:[#allocation7 + $0xc8] sm:$0xf]
    %v175 = vld [vmem:[#allocation7 + $0xcc] sm:$0xf]
    %v176 = vld [vmem:[#allocation7 + $0xd0] sm:$0xf]
    %v177 = vld [vmem:[#allocation7 + $0xd4] sm:$0xf]
    %v178 = vld [vmem:[#allocation7 + $0xd8] sm:$0xf]
    %v179 = vld [vmem:[#allocation7 + $0xdc] sm:$0xf]
    %v180 = vld [vmem:[#allocation7 + $0xe0] sm:$0xf]
    %v181 = vld [vmem:[#allocation7 + $0xe4] sm:$0xf]
    %v182 = vld [vmem:[#allocation7 + $0xe8] sm:$0xf]
    %v183 = vld [vmem:[#allocation7 + $0xec] sm:$0xf]
    %v184 = vld [vmem:[#allocation7 + $0xf0] sm:$0xf]
    %v185 = vld [vmem:[#allocation7 + $0xf4] sm:$0xf]
    %v186 = vld [vmem:[#allocation7 + $0xf8] sm:$0xf]
    %v187 = vld [vmem:[#allocation7 + $0xfc] sm:$0xf]
    %v188 = vld [vmem:[#allocation7 + $0x100] sm:$0xf]
    %v189 = vld [vmem:[#allocation7 + $0x104] sm:$0xf]
    %v190 = vld [vmem:[#allocation7 + $0x108] sm:$0xf]
    %v191 = vld [vmem:[#allocation7 + $0x10c] sm:$0xf]
    %v192 = vld [vmem:[#allocation7 + $0x110] sm:$0xf]
    %v193 = vld [vmem:[#allocation7 + $0x114] sm:$0xf]
    %v194 = vld [vmem:[#allocation7 + $0x118] sm:$0xf]
    %v195 = vld [vmem:[#allocation7 + $0x11c] sm:$0xf]
    %v196 = vld [vmem:[#allocation7 + $0x120] sm:$0xf]
    %v197 = vld [vmem:[#allocation7 + $0x124] sm:$0xf]
    %v198 = vld [vmem:[#allocation7 + $0x128] sm:$0xf]
    %v199 = vld [vmem:[#allocation7 + $0x12c] sm:$0xf]
    %v200 = vld [vmem:[#allocation7 + $0x130] sm:$0xf]
    %v201 = vld [vmem:[#allocation7 + $0x134] sm:$0xf]
    %v202 = vld [vmem:[#allocation7 + $0x138] sm:$0xf]
    %v203 = vld [vmem:[#allocation7 + $0x13c] sm:$0xf]
    %v204 = vld [vmem:[#allocation7 + $0x140] sm:$0xf]
    %v205 = vld [vmem:[#allocation7 + $0x144] sm:$0xf]
    %v206 = vld [vmem:[#allocation7 + $0x148] sm:$0xf]
    %v207 = vld [vmem:[#allocation7 + $0x14c] sm:$0xf]
    %v208 = vld [vmem:[#allocation7 + $0x150] sm:$0xf]
    %v209 = vld [vmem:[#allocation7 + $0x154] sm:$0xf]
    %v210 = vld [vmem:[#allocation7 + $0x158] sm:$0xf]
    %v211 = vld [vmem:[#allocation7 + $0x15c] sm:$0xf]
    %v212 = vld [vmem:[#allocation7 + $0x160] sm:$0xf]
    %v213 = vld [vmem:[#allocation7 + $0x164] sm:$0xf]
    %v214 = vld [vmem:[#allocation7 + $0x168] sm:$0xf]
    %v215 = vld [vmem:[#allocation7 + $0x16c] sm:$0xf]
    %v216 = vld [vmem:[#allocation7 + $0x170] sm:$0xf]
    %v217 = vld [vmem:[#allocation7 + $0x174] sm:$0xf]
    %v218 = vld [vmem:[#allocation7 + $0x178] sm:$0xf]
    %v219 = vld [vmem:[#allocation7 + $0x17c] sm:$0xf]
    %v220 = vld [vmem:[#allocation7 + $0x180] sm:$0xf]
    %v221 = vld [vmem:[#allocation7 + $0x184] sm:$0xf]
    %v222 = vld [vmem:[#allocation7 + $0x188] sm:$0xf]
    %v223 = vld [vmem:[#allocation7 + $0x18c] sm:$0xf]
    %v224 = vld [vmem:[#allocation7 + $0x190] sm:$0xf]
    %v225 = vld [vmem:[#allocation7 + $0x194] sm:$0xf]
    %v226 = vld [vmem:[#allocation7 + $0x198] sm:$0xf]
    %v227 = vld [vmem:[#allocation7 + $0x19c] sm:$0xf]
    %v228 = vld [vmem:[#allocation7 + $0x1a0] sm:$0xf]
    %v229 = vld [vmem:[#allocation7 + $0x1a4] sm:$0xf]
    %v230 = vld [vmem:[#allocation7 + $0x1a8] sm:$0xf]
    %v231 = vld [vmem:[#allocation7 + $0x1ac] sm:$0xf]
    %v232 = vld [vmem:[#allocation7 + $0x1b0] sm:$0xf]
    %v233 = vld [vmem:[#allocation7 + $0x1b4] sm:$0xf]
    %v234 = vld [vmem:[#allocation7 + $0x1b8] sm:$0xf]
    %v235 = vld [vmem:[#allocation7 + $0x1bc] sm:$0xf]
    %v236 = vld [vmem:[#allocation7 + $0x1c0] sm:$0xf]
    %v237 = vld [vmem:[#allocation7 + $0x1c4] sm:$0xf]
    %v238 = vld [vmem:[#allocation7 + $0x1c8] sm:$0xf]
    %v239 = vld [vmem:[#allocation7 + $0x1cc] sm:$0xf]
    %v240 = vld [vmem:[#allocation7 + $0x1d0] sm:$0xf]
    %v241 = vld [vmem:[#allocation7 + $0x1d4] sm:$0xf]
    %v242 = vld [vmem:[#allocation7 + $0x1d8] sm:$0xf]
    %v243 = vld [vmem:[#allocation7 + $0x1dc] sm:$0xf]
    %v244 = vld [vmem:[#allocation7 + $0x1e0] sm:$0xf]
    %v245 = vld [vmem:[#allocation7 + $0x1e4] sm:$0xf]
    %v246 = vld [vmem:[#allocation7 + $0x1e8] sm:$0xf]
    %v247 = vld [vmem:[#allocation7 + $0x1ec] sm:$0xf]
    %v248 = vld [vmem:[#allocation7 + $0x1f0] sm:$0xf]
    %v249 = vld [vmem:[#allocation7 + $0x1f4] sm:$0xf]
    %v250 = vld [vmem:[#allocation7 + $0x1f8] sm:$0xf]
    %v251 = vld [vmem:[#allocation7 + $0x1fc] sm:$0xf]
    %v253 = vcombine.high %v52, %v52
    %v255 = vunpack.c.l.s4 1966171168
    %v256 = vunpack.c.0.s8 %v255
    %v257 = vlaneseq
    %v258 = vshrl.u32 %v257, 7
    %v259 = vsub.s32 %v256, %v258
    %v260 = vrot.slane %v52, %v259
    %v262 = vunpack.c.l.s4 1966171168
    %v263 = vunpack.c.0.s8 %v262
    %v264 = vlaneseq
    %v265 = vshrl.u32 %v264, 7
    %v266 = vsub.s32 %v263, %v265
    %v267 = vrot.slane %v253, %v266
    %v268 = vcombine.high %v260, %v260
    %v269 = vcombine.high %v267, %v267
    %v271 = vunpack.c.l.s4 1966171168
    %v272 = vunpack.c.0.s8 %v271
    %v273 = vlaneseq
    %v274 = vshrl.u32 %v273, 7
    %v275 = vsub.s32 %v272, %v274
    %v276 = vrot.slane %v260, %v275
    %v278 = vunpack.c.l.s4 1966171168
    %v279 = vunpack.c.0.s8 %v278
    %v280 = vlaneseq
    %v281 = vshrl.u32 %v280, 7
    %v282 = vsub.s32 %v279, %v281
    %v283 = vrot.slane %v267, %v282
    %v285 = vunpack.c.l.s4 1966171168
    %v286 = vunpack.c.0.s8 %v285
    %v287 = vlaneseq
    %v288 = vshrl.u32 %v287, 7
    %v289 = vsub.s32 %v286, %v288
    %v290 = vrot.slane %v268, %v289
    %v292 = vunpack.c.l.s4 1966171168
    %v293 = vunpack.c.0.s8 %v292
    %v294 = vlaneseq
    %v295 = vshrl.u32 %v294, 7
    %v296 = vsub.s32 %v293, %v295
    %v297 = vrot.slane %v269, %v296
    %v298 = vcombine.high %v276, %v276
    %v299 = vcombine.high %v283, %v283
    %v300 = vcombine.high %v290, %v290
    %v301 = vcombine.high %v297, %v297
    %v438 = vunpack.c.l.b16 %v124
    %v439 = vunpack.c.l.b16 %v125
    %v440 = vunpack.c.l.b16 %v126
    %v441 = vunpack.c.l.b16 %v127
    %v442 = vunpack.c.l.b16 %v128
    %v443 = vunpack.c.l.b16 %v129
    %v444 = vunpack.c.l.b16 %v130
    %v445 = vunpack.c.l.b16 %v131
    %v446 = vunpack.c.l.b16 %v132
    %v447 = vunpack.c.l.b16 %v133
    %v448 = vunpack.c.l.b16 %v134
    %v449 = vunpack.c.l.b16 %v135
    %v450 = vunpack.c.l.b16 %v136
    %v451 = vunpack.c.l.b16 %v137
    %v452 = vunpack.c.l.b16 %v138
    %v453 = vunpack.c.l.b16 %v139
    %v454 = vunpack.c.l.b16 %v140
    %v455 = vunpack.c.l.b16 %v141
    %v456 = vunpack.c.l.b16 %v142
    %v457 = vunpack.c.l.b16 %v143
    %v458 = vunpack.c.l.b16 %v144
    %v459 = vunpack.c.l.b16 %v145
    %v460 = vunpack.c.l.b16 %v146
    %v461 = vunpack.c.l.b16 %v147
    %v462 = vunpack.c.l.b16 %v148
    %v463 = vunpack.c.l.b16 %v149
    %v464 = vunpack.c.l.b16 %v150
    %v465 = vunpack.c.l.b16 %v151
    %v466 = vunpack.c.l.b16 %v152
    %v467 = vunpack.c.l.b16 %v153
    %v468 = vunpack.c.l.b16 %v154
    %v469 = vunpack.c.l.b16 %v155
    %v470 = vunpack.c.l.b16 %v156
    %v471 = vunpack.c.l.b16 %v157
    %v472 = vunpack.c.l.b16 %v158
    %v473 = vunpack.c.l.b16 %v159
    %v474 = vunpack.c.l.b16 %v160
    %v475 = vunpack.c.l.b16 %v161
    %v476 = vunpack.c.l.b16 %v162
    %v477 = vunpack.c.l.b16 %v163
    %v478 = vunpack.c.l.b16 %v164
    %v479 = vunpack.c.l.b16 %v165
    %v480 = vunpack.c.l.b16 %v166
    %v481 = vunpack.c.l.b16 %v167
    %v482 = vunpack.c.l.b16 %v168
    %v483 = vunpack.c.l.b16 %v169
    %v484 = vunpack.c.l.b16 %v170
    %v485 = vunpack.c.l.b16 %v171
    %v486 = vunpack.c.l.b16 %v172
    %v487 = vunpack.c.l.b16 %v173
    %v488 = vunpack.c.l.b16 %v174
    %v489 = vunpack.c.l.b16 %v175
    %v490 = vunpack.c.l.b16 %v176
    %v491 = vunpack.c.l.b16 %v177
    %v492 = vunpack.c.l.b16 %v178
    %v493 = vunpack.c.l.b16 %v179
    %v494 = vunpack.c.l.b16 %v180
    %v495 = vunpack.c.l.b16 %v181
    %v496 = vunpack.c.l.b16 %v182
    %v497 = vunpack.c.l.b16 %v183
    %v498 = vunpack.c.l.b16 %v184
    %v499 = vunpack.c.l.b16 %v185
    %v500 = vunpack.c.l.b16 %v186
    %v501 = vunpack.c.l.b16 %v187
    %v502 = vunpack.c.l.b16 %v188
    %v503 = vunpack.c.l.b16 %v189
    %v504 = vunpack.c.l.b16 %v190
    %v505 = vunpack.c.l.b16 %v191
    %v506 = vunpack.c.l.b16 %v192
    %v507 = vunpack.c.l.b16 %v193
    %v508 = vunpack.c.l.b16 %v194
    %v509 = vunpack.c.l.b16 %v195
    %v510 = vunpack.c.l.b16 %v196
    %v511 = vunpack.c.l.b16 %v197
    %v512 = vunpack.c.l.b16 %v198
    %v513 = vunpack.c.l.b16 %v199
    %v514 = vunpack.c.l.b16 %v200
    %v515 = vunpack.c.l.b16 %v201
    %v516 = vunpack.c.l.b16 %v202
    %v517 = vunpack.c.l.b16 %v203
    %v518 = vunpack.c.l.b16 %v204
    %v519 = vunpack.c.l.b16 %v205
    %v520 = vunpack.c.l.b16 %v206
    %v521 = vunpack.c.l.b16 %v207
    %v522 = vunpack.c.l.b16 %v208
    %v523 = vunpack.c.l.b16 %v209
    %v524 = vunpack.c.l.b16 %v210
    %v525 = vunpack.c.l.b16 %v211
    %v526 = vunpack.c.l.b16 %v212
    %v527 = vunpack.c.l.b16 %v213
    %v528 = vunpack.c.l.b16 %v214
    %v529 = vunpack.c.l.b16 %v215
    %v530 = vunpack.c.l.b16 %v216
    %v531 = vunpack.c.l.b16 %v217
    %v532 = vunpack.c.l.b16 %v218
    %v533 = vunpack.c.l.b16 %v219
    %v534 = vunpack.c.l.b16 %v220
    %v535 = vunpack.c.l.b16 %v221
    %v536 = vunpack.c.l.b16 %v222
    %v537 = vunpack.c.l.b16 %v223
    %v538 = vunpack.c.l.b16 %v224
    %v539 = vunpack.c.l.b16 %v225
    %v540 = vunpack.c.l.b16 %v226
    %v541 = vunpack.c.l.b16 %v227
    %v542 = vunpack.c.l.b16 %v228
    %v543 = vunpack.c.l.b16 %v229
    %v544 = vunpack.c.l.b16 %v230
    %v545 = vunpack.c.l.b16 %v231
    %v546 = vunpack.c.l.b16 %v232
    %v547 = vunpack.c.l.b16 %v233
    %v548 = vunpack.c.l.b16 %v234
    %v549 = vunpack.c.l.b16 %v235
    %v550 = vunpack.c.l.b16 %v236
    %v551 = vunpack.c.l.b16 %v237
    %v552 = vunpack.c.l.b16 %v238
    %v553 = vunpack.c.l.b16 %v239
    %v554 = vunpack.c.l.b16 %v240
    %v555 = vunpack.c.l.b16 %v241
    %v556 = vunpack.c.l.b16 %v242
    %v557 = vunpack.c.l.b16 %v243
    %v558 = vunpack.c.l.b16 %v244
    %v559 = vunpack.c.l.b16 %v245
    %v560 = vunpack.c.l.b16 %v246
    %v561 = vunpack.c.l.b16 %v247
    %v562 = vunpack.c.l.b16 %v248
    %v563 = vunpack.c.l.b16 %v249
    %v564 = vunpack.c.l.b16 %v250
    %v565 = vunpack.c.l.b16 %v251
    %v566 = vpack.c.b16 %v439, %v438
    %v567 = vpack.c.b16 %v441, %v440
    %v568 = vpack.c.b16 %v443, %v442
    %v569 = vpack.c.b16 %v445, %v444
    %v570 = vpack.c.b16 %v447, %v446
    %v571 = vpack.c.b16 %v449, %v448
    %v572 = vpack.c.b16 %v451, %v450
    %v573 = vpack.c.b16 %v453, %v452
    %v574 = vpack.c.b16 %v455, %v454
    %v575 = vpack.c.b16 %v457, %v456
    %v576 = vpack.c.b16 %v459, %v458
    %v577 = vpack.c.b16 %v461, %v460
    %v578 = vpack.c.b16 %v463, %v462
    %v579 = vpack.c.b16 %v465, %v464
    %v580 = vpack.c.b16 %v467, %v466
    %v581 = vpack.c.b16 %v469, %v468
    %v582 = vpack.c.b16 %v471, %v470
    %v583 = vpack.c.b16 %v473, %v472
    %v584 = vpack.c.b16 %v475, %v474
    %v585 = vpack.c.b16 %v477, %v476
    %v586 = vpack.c.b16 %v479, %v478
    %v587 = vpack.c.b16 %v481, %v480
    %v588 = vpack.c.b16 %v483, %v482
    %v589 = vpack.c.b16 %v485, %v484
    %v590 = vpack.c.b16 %v487, %v486
    %v591 = vpack.c.b16 %v489, %v488
    %v592 = vpack.c.b16 %v491, %v490
    %v593 = vpack.c.b16 %v493, %v492
    %v594 = vpack.c.b16 %v495, %v494
    %v595 = vpack.c.b16 %v497, %v496
    %v596 = vpack.c.b16 %v499, %v498
    %v597 = vpack.c.b16 %v501, %v500
    %v598 = vpack.c.b16 %v503, %v502
    %v599 = vpack.c.b16 %v505, %v504
    %v600 = vpack.c.b16 %v507, %v506
    %v601 = vpack.c.b16 %v509, %v508
    %v602 = vpack.c.b16 %v511, %v510
    %v603 = vpack.c.b16 %v513, %v512
    %v604 = vpack.c.b16 %v515, %v514
    %v605 = vpack.c.b16 %v517, %v516
    %v606 = vpack.c.b16 %v519, %v518
    %v607 = vpack.c.b16 %v521, %v520
    %v608 = vpack.c.b16 %v523, %v522
    %v609 = vpack.c.b16 %v525, %v524
    %v610 = vpack.c.b16 %v527, %v526
    %v611 = vpack.c.b16 %v529, %v528
    %v612 = vpack.c.b16 %v531, %v530
    %v613 = vpack.c.b16 %v533, %v532
    %v614 = vpack.c.b16 %v535, %v534
    %v615 = vpack.c.b16 %v537, %v536
    %v616 = vpack.c.b16 %v539, %v538
    %v617 = vpack.c.b16 %v541, %v540
    %v618 = vpack.c.b16 %v543, %v542
    %v619 = vpack.c.b16 %v545, %v544
    %v620 = vpack.c.b16 %v547, %v546
    %v621 = vpack.c.b16 %v549, %v548
    %v622 = vpack.c.b16 %v551, %v550
    %v623 = vpack.c.b16 %v553, %v552
    %v624 = vpack.c.b16 %v555, %v554
    %v625 = vpack.c.b16 %v557, %v556
    %v626 = vpack.c.b16 %v559, %v558
    %v627 = vpack.c.b16 %v561, %v560
    %v628 = vpack.c.b16 %v563, %v562
    %v629 = vpack.c.b16 %v565, %v564
    %694 = vmatprep.subr.bf16.mxu0 0
    %695 = vmatpush1.bf16.msra.mxu0 %v566
    %696 = vmatprep.subr.bf16.mxu0 0
    %697 = vmatpush1.bf16.msra.mxu0 %v567
    %698 = vmatprep.subr.bf16.mxu0 0
    %699 = vmatpush1.bf16.msra.mxu0 %v568
    %700 = vmatprep.subr.bf16.mxu0 0
    %701 = vmatpush1.bf16.msra.mxu0 %v569
    %702 = vmatprep.subr.bf16.mxu0 0
    %703 = vmatpush1.bf16.msra.mxu0 %v570
    %704 = vmatprep.subr.bf16.mxu0 0
    %705 = vmatpush1.bf16.msra.mxu0 %v571
    %706 = vmatprep.subr.bf16.mxu0 0
    %707 = vmatpush1.bf16.msra.mxu0 %v572
    %708 = vmatprep.subr.bf16.mxu0 0
    %709 = vmatpush1.bf16.msra.mxu0 %v573
    %710 = vmatprep.subr.bf16.mxu0 0
    %711 = vmatpush1.bf16.msra.mxu0 %v574
    %712 = vmatprep.subr.bf16.mxu0 0
    %713 = vmatpush1.bf16.msra.mxu0 %v575
    %714 = vmatprep.subr.bf16.mxu0 0
    %715 = vmatpush1.bf16.msra.mxu0 %v576
    %716 = vmatprep.subr.bf16.mxu0 0
    %717 = vmatpush1.bf16.msra.mxu0 %v577
    %718 = vmatprep.subr.bf16.mxu0 0
    %719 = vmatpush1.bf16.msra.mxu0 %v578
    %720 = vmatprep.subr.bf16.mxu0 0
    %721 = vmatpush1.bf16.msra.mxu0 %v579
    %722 = vmatprep.subr.bf16.mxu0 0
    %723 = vmatpush1.bf16.msra.mxu0 %v580
    %724 = vmatprep.subr.bf16.mxu0 0
    %725 = vmatpush1.bf16.msra.mxu0 %v581
    %726 = vmatprep.mubr.bf16.mxu0 %v290
    %727 = vmatmul.mubr.bf16.gmra.mrb[0].mxu0 %v276
    %v728 = vpop.f32.mrb[0].mxu0
    %v729 = vadd.f32 0.0, %v728
    %v730 = vpop.f32.mrb[0].mxu0
    %v731 = vpop.f32.mrb[0].mxu0
    %v732 = vpop.f32.mrb[0].mxu0
    %733 = vdwg.mxu0
    %734 = vmatprep.subr.bf16.mxu0 0
    %735 = vmatpush1.bf16.msra.mxu0 %v582
    %736 = vmatprep.subr.bf16.mxu0 0
    %737 = vmatpush1.bf16.msra.mxu0 %v583
    %738 = vmatprep.subr.bf16.mxu0 0
    %739 = vmatpush1.bf16.msra.mxu0 %v584
    %740 = vmatprep.subr.bf16.mxu0 0
    %741 = vmatpush1.bf16.msra.mxu0 %v585
    %742 = vmatprep.subr.bf16.mxu0 0
    %743 = vmatpush1.bf16.msra.mxu0 %v586
    %744 = vmatprep.subr.bf16.mxu0 0
    %745 = vmatpush1.bf16.msra.mxu0 %v587
    %746 = vmatprep.subr.bf16.mxu0 0
    %747 = vmatpush1.bf16.msra.mxu0 %v588
    %748 = vmatprep.subr.bf16.mxu0 0
    %749 = vmatpush1.bf16.msra.mxu0 %v589
    %750 = vmatprep.subr.bf16.mxu0 0
    %751 = vmatpush1.bf16.msra.mxu0 %v590
    %752 = vmatprep.subr.bf16.mxu0 0
    %753 = vmatpush1.bf16.msra.mxu0 %v591
    %754 = vmatprep.subr.bf16.mxu0 0
    %755 = vmatpush1.bf16.msra.mxu0 %v592
    %756 = vmatprep.subr.bf16.mxu0 0
    %757 = vmatpush1.bf16.msra.mxu0 %v593
    %758 = vmatprep.subr.bf16.mxu0 0
    %759 = vmatpush1.bf16.msra.mxu0 %v594
    %760 = vmatprep.subr.bf16.mxu0 0
    %761 = vmatpush1.bf16.msra.mxu0 %v595
    %762 = vmatprep.subr.bf16.mxu0 0
    %763 = vmatpush1.bf16.msra.mxu0 %v596
    %764 = vmatprep.subr.bf16.mxu0 0
    %765 = vmatpush1.bf16.msra.mxu0 %v597
    %766 = vmatprep.mubr.bf16.mxu0 %v300
    %767 = vmatmul.mubr.bf16.gmra.mrb[0].mxu0 %v298
    %v768 = vpop.f32.mrb[0].mxu0
    %v769 = vadd.f32 %v729, %v768
    %v770 = vpop.f32.mrb[0].mxu0
    %v771 = vpop.f32.mrb[0].mxu0
    %v772 = vpop.f32.mrb[0].mxu0
    %773 = vdwg.mxu0
    %774 = vmatprep.subr.bf16.mxu0 0
    %775 = vmatpush1.bf16.msra.mxu0 %v598
    %776 = vmatprep.subr.bf16.mxu0 0
    %777 = vmatpush1.bf16.msra.mxu0 %v599
    %778 = vmatprep.subr.bf16.mxu0 0
    %779 = vmatpush1.bf16.msra.mxu0 %v600
    %780 = vmatprep.subr.bf16.mxu0 0
    %781 = vmatpush1.bf16.msra.mxu0 %v601
    %782 = vmatprep.subr.bf16.mxu0 0
    %783 = vmatpush1.bf16.msra.mxu0 %v602
    %784 = vmatprep.subr.bf16.mxu0 0
    %785 = vmatpush1.bf16.msra.mxu0 %v603
    %786 = vmatprep.subr.bf16.mxu0 0
    %787 = vmatpush1.bf16.msra.mxu0 %v604
    %788 = vmatprep.subr.bf16.mxu0 0
    %789 = vmatpush1.bf16.msra.mxu0 %v605
    %790 = vmatprep.subr.bf16.mxu0 0
    %791 = vmatpush1.bf16.msra.mxu0 %v606
    %792 = vmatprep.subr.bf16.mxu0 0
    %793 = vmatpush1.bf16.msra.mxu0 %v607
    %794 = vmatprep.subr.bf16.mxu0 0
    %795 = vmatpush1.bf16.msra.mxu0 %v608
    %796 = vmatprep.subr.bf16.mxu0 0
    %797 = vmatpush1.bf16.msra.mxu0 %v609
    %798 = vmatprep.subr.bf16.mxu0 0
    %799 = vmatpush1.bf16.msra.mxu0 %v610
    %800 = vmatprep.subr.bf16.mxu0 0
    %801 = vmatpush1.bf16.msra.mxu0 %v611
    %802 = vmatprep.subr.bf16.mxu0 0
    %803 = vmatpush1.bf16.msra.mxu0 %v612
    %804 = vmatprep.subr.bf16.mxu0 0
    %805 = vmatpush1.bf16.msra.mxu0 %v613
    %806 = vmatprep.mubr.bf16.mxu0 %v297
    %807 = vmatmul.mubr.bf16.gmra.mrb[0].mxu0 %v283
    %v808 = vpop.f32.mrb[0].mxu0
    %v809 = vadd.f32 %v769, %v808
    %v810 = vpop.f32.mrb[0].mxu0
    %v811 = vpop.f32.mrb[0].mxu0
    %v812 = vpop.f32.mrb[0].mxu0
    %813 = vdwg.mxu0
    %814 = vmatprep.subr.bf16.mxu0 0
    %815 = vmatpush1.bf16.msra.mxu0 %v614
    %816 = vmatprep.subr.bf16.mxu0 0
    %817 = vmatpush1.bf16.msra.mxu0 %v615
    %818 = vmatprep.subr.bf16.mxu0 0
    %819 = vmatpush1.bf16.msra.mxu0 %v616
    %820 = vmatprep.subr.bf16.mxu0 0
    %821 = vmatpush1.bf16.msra.mxu0 %v617
    %822 = vmatprep.subr.bf16.mxu0 0
    %823 = vmatpush1.bf16.msra.mxu0 %v618
    %824 = vmatprep.subr.bf16.mxu0 0
    %825 = vmatpush1.bf16.msra.mxu0 %v619
    %826 = vmatprep.subr.bf16.mxu0 0
    %827 = vmatpush1.bf16.msra.mxu0 %v620
    %828 = vmatprep.subr.bf16.mxu0 0
    %829 = vmatpush1.bf16.msra.mxu0 %v621
    %830 = vmatprep.subr.bf16.mxu0 0
    %831 = vmatpush1.bf16.msra.mxu0 %v622
    %832 = vmatprep.subr.bf16.mxu0 0
    %833 = vmatpush1.bf16.msra.mxu0 %v623
    %834 = vmatprep.subr.bf16.mxu0 0
    %835 = vmatpush1.bf16.msra.mxu0 %v624
    %836 = vmatprep.subr.bf16.mxu0 0
    %837 = vmatpush1.bf16.msra.mxu0 %v625
    %838 = vmatprep.subr.bf16.mxu0 0
    %839 = vmatpush1.bf16.msra.mxu0 %v626
    %840 = vmatprep.subr.bf16.mxu0 0
    %841 = vmatpush1.bf16.msra.mxu0 %v627
    %842 = vmatprep.subr.bf16.mxu0 0
    %843 = vmatpush1.bf16.msra.mxu0 %v628
    %844 = vmatprep.subr.bf16.mxu0 0
    %845 = vmatpush1.bf16.msra.mxu0 %v629
    %846 = vmatprep.mubr.bf16.mxu0 %v301
    %847 = vmatmul.mubr.bf16.gmra.mrb[0].mxu0 %v299
    %v848 = vpop.f32.mrb[0].mxu0
    %v849 = vadd.f32 %v809, %v848
    %v850 = vpop.f32.mrb[0].mxu0
    %v851 = vpop.f32.mrb[0].mxu0
    %v852 = vpop.f32.mrb[0].mxu0
    %853 = vdwg.mxu0
    %v854 = vadd.f32 %v123, %v849
    %855 = vst [vmem:[#allocation2] sm:$0x3] %v854
    // Predicated region
    $region30: #{tpu_custom_call.1} parent=1 // pred_check
      %p856 = pneg %p45
    $region31: #{tpu_custom_call.1} parent=1 // pred_check_branch
      %858 = sbr.rel (%p856) target = $region33
    $region32: #{tpu_custom_call.1} parent=1 // pred_region
      %v859 = vld [vmem:[#allocation3] sm:$0x3]
      %v860 = vmax.f32 %v859, 1e-24
      %v861 = vrsqrt.pop %v860
      %v862 = vld [vmem:[%s2] sm:$0x1]
      %v863 = vsub.f32 %v861, 1.0
      %v865 = vlaneseq
      %v866 = vshrl.u32 %v865, 7
      %v867 = vsub.s32 0, %v866
      %v868 = vrot.slane %v862, %v867
      %871 = vset.pattern.permute.xlu0 0
      %872 = vperm.xlu0 %871, %v863
      %v873 = vpop.permute.xlu0 %872
      %v875 = vmul.f32 %v868, %v873
      %v876 = vadd.f32 %v875, 1.0
      %v877 = vld [vmem:[#allocation2] sm:$0x3]
      %v878 = vmul.f32 %v877, %v876
      %v879 = vld [vmem:[%s3] sm:$0x1]
      %v881 = vlaneseq
      %v882 = vshrl.u32 %v881, 7
      %v883 = vsub.s32 0, %v882
      %v884 = vrot.slane %v879, %v883
      %v886 = vadd.f32 %v878, %v884
      %887 = vst [vmem:[#allocation9] sm:$0x3] %v886
    $region33: #{tpu_custom_call.1} parent=1 // pred_fallthru
      _
    // Predicated region
    $region34: #{tpu_custom_call.1} parent=1 // pred_check
      _
    $region35: #{tpu_custom_call.1} parent=1 // pred_check_branch
      %889 = sbr.rel (0) target = $region37
    $region36: #{tpu_custom_call.1} parent=1 // pred_region
      %s891 = ssub.s32 32, 32
      %892 = vsyncadd [#allocation6], %s891
      %s894 = sshll.u32 [#allocation9], 4
      %s895 = int_to_ptr.vmem [resolvable:$true] %s894
      %897 = dma.vmem_to_hbm [thread:$0]  %s895, 32, %s4, [#allocation6]
    $region37: #{tpu_custom_call.1} parent=1 // pred_fallthru
      _
    // Predicated region
    $region38: #{tpu_custom_call.1} parent=1 // pred_check
      _
    $region39: #{tpu_custom_call.1} parent=1 // pred_check_branch
      %899 = sbr.rel (0) target = $region41
    $region40: #{tpu_custom_call.1} parent=1 // pred_region
      %900 = dma.done [#allocation6], 32
    $region41: #{tpu_custom_call.1} parent=1 // pred_fallthru
      _
    %901 = vsyncpa [#allocation5], 1
    %902 = vsyncpa [#allocation8], 1
    %903 = vsyncpa [#allocation6], 1

</llo_original>
